<compile_context>
chip_gen: v7x
topology: tpu7x:2x2x1
jax: 0.10.0
libtpu: 0.0.40
codegen_flags: <defaults>
</compile_context>

<pallas_src>
import functools

import jax
import jax.numpy as jnp
from jax import lax
from jax.experimental import pallas as pl
from jax.experimental.pallas import tpu as pltpu

_CHUNK = 256  # edges per inner chunk == lane width of each output row (x128 OK)


def _extractor_mlp_kernel(f12_ref, w1_ref, b1_ref, w2_ref, b2_ref, w3_ref,
                          b3_ref, o_ref):
    """One tile of edges through Linear->ReLU->Linear->ReLU->Linear.

    f12_ref : [tile_rows*CHUNK, 2H] bf16   edge features (concat of emb[col], emb[row])
    w1_ref  : [2H, 4H] bf16,  b1_ref: [1, 4H] f32
    w2_ref  : [4H, H]  bf16,  b2_ref: [1, H]  f32
    w3_ref  : [1, H]   f32,   b3_ref: (1,)    f32 (SMEM scalar)
    o_ref   : [tile_rows, CHUNK] f32  (lane-dense output rows, one per chunk)
    """
    n_chunks, chunk = o_ref.shape

    # Weights / biases loaded once per grid step (constant index_map -> single DMA).
    w1 = w1_ref[...]
    w2 = w2_ref[...]
    b1 = b1_ref[...]
    b2 = b2_ref[...]
    w3 = w3_ref[...]
    b3 = b3_ref[0]

    def body(c, carry):
        off = pl.multiple_of(c * chunk, chunk)
        x = f12_ref[pl.ds(off, chunk), :]                       # [chunk, 2H] bf16

        # Layer 1: single K=2H bf16 matmul, f32 accumulate.
        h1 = jnp.dot(x, w1, preferred_element_type=jnp.float32)
        h1 = jnp.maximum(h1 + b1, 0.0)                          # [chunk, 4H] f32

        # Layer 2: bf16 operands, f32 accumulate.
        h2 = jnp.dot(h1.astype(jnp.bfloat16), w2,
                     preferred_element_type=jnp.float32)
        h2 = jnp.maximum(h2 + b2, 0.0)                          # [chunk, H] f32

        # Layer 3 (out_dim == 1): contract H against H -> lane-dense [1, chunk].
        row = lax.dot_general(w3, h2,
                              dimension_numbers=(((1,), (1,)), ((), ())),
                              preferred_element_type=jnp.float32)
        o_ref[pl.ds(c, 1), :] = (row + b3).astype(o_ref.dtype)
        return carry

    lax.fori_loop(0, n_chunks, body, None, unroll=True)


@functools.partial(jax.jit, static_argnames=("tile_e",))
def extractor_mlp_forward(emb, edge_index, batch, params, *, tile_e=2048):
    """JAX wrapper: gather/concat glue in plain JAX, MLP hot path in Pallas.

    emb:        [N, H]   float32 node embeddings
    edge_index: [2, E]   int32   (col, row)
    batch:      [N]      int32   graph id per node (only feeds the omitted
                                  InstanceNorm layers; unused at inference)
    Note: matmul operands are cast to bf16 (f32 accumulation); output is an
    inference-grade approximation of the fp32 PyTorch module.
    """
    del batch  # only needed for the (omitted) batch-keyed InstanceNorm
    w1, b1, w2, b2, w3, b3 = params
    H = emb.shape[-1]
    E = edge_index.shape[-1]
    chunk = _CHUNK

    if tile_e <= 0 or tile_e % chunk != 0:
        raise ValueError(f"tile_e must be a positive multiple of {chunk}, got {tile_e}")

    # Output slab geometry: (rows, CHUNK) lane-dense, rows of CHUNK edges each.
    rows = pl.cdiv(E, chunk)
    tile_rows = tile_e // chunk
    if rows <= tile_rows:
        tile_rows = rows                       # single grid step; block == full array
    else:
        # Multi-step grid: block sublane dim must be a multiple of 8 (f32 quantum).
        tile_rows = max(8, (tile_rows // 8) * 8)
        rows = pl.cdiv(rows, tile_rows) * tile_rows
    e_pad = rows * chunk
    grid = (rows // tile_rows,)

    # Pad the (cheap) int32 indices, not the bf16 feature streams.
    col = edge_index[0].astype(jnp.int32)
    row_idx = edge_index[1].astype(jnp.int32)
    pad = e_pad - E
    if pad:
        col = jnp.pad(col, (0, pad))           # pad with node 0; rows sliced off below
        row_idx = jnp.pad(row_idx, (0, pad))

    # Single [E_pad, 2H] bf16 operand -> one K=2H MXU matmul in layer 1.
    emb_bf = emb.astype(jnp.bfloat16)
    f12 = jnp.concatenate([jnp.take(emb_bf, col, axis=0),
                           jnp.take(emb_bf, row_idx, axis=0)], axis=-1)

    # Weights for the MXU in bf16; biases / final weight in f32 (VPU path).
    w1b = w1.astype(jnp.bfloat16)              # [2H, 4H]
    w2b = w2.astype(jnp.bfloat16)              # [4H, H]
    b1r = b1.reshape(1, 4 * H).astype(jnp.float32)
    b2r = b2.reshape(1, H).astype(jnp.float32)
    w3r = w3.reshape(1, H).astype(jnp.float32)
    b3s = b3.reshape(1).astype(jnp.float32)    # SMEM scalar

    out = pl.pallas_call(
        _extractor_mlp_kernel,
        out_shape=jax.ShapeDtypeStruct((rows, chunk), jnp.float32),
        grid_spec=pltpu.PrefetchScalarGridSpec(
            num_scalar_prefetch=0,
            grid=grid,
            in_specs=[
                pl.BlockSpec((tile_rows * chunk, 2 * H), lambda i: (i, 0)),  # f12 tile
                pl.BlockSpec((2 * H, 4 * H), lambda i: (0, 0)),              # W1
                pl.BlockSpec((1, 4 * H), lambda i: (0, 0)),                  # b1
                pl.BlockSpec((4 * H, H), lambda i: (0, 0)),                  # W2
                pl.BlockSpec((1, H), lambda i: (0, 0)),                      # b2
                pl.BlockSpec((1, H), lambda i: (0, 0)),                      # W3 (row)
                pl.BlockSpec(memory_space=pltpu.MemorySpace.SMEM),           # b3 scalar
            ],
            out_specs=pl.BlockSpec((tile_rows, chunk), lambda i: (i, 0)),
        ),
        compiler_params=pltpu.CompilerParams(
            dimension_semantics=("parallel",)),
    )(f12, w1b, b1r, w2b, b2r, w3r, b3s)

    # Row-major flatten of (rows, CHUNK) recovers edge order; drop padding.
    return out.reshape(e_pad, 1)[:E]                   # [E, 1]


def init_params(key, hidden_size):
    """Deterministic init of MLP([2H, 4H, H, 1]) parameters.

    Weights are stored already transposed to (in, out) so that y = x @ W + b
    matches nn.Linear's y = x @ W_torch.T + b.
    """
    H = hidden_size
    dims = [2 * H, 4 * H, H, 1]
    keys = jax.random.split(key, 2 * (len(dims) - 1))
    params = []
    for i in range(len(dims) - 1):
        fan_in, fan_out = dims[i], dims[i + 1]
        bound = 1.0 / jnp.sqrt(fan_in)
        w = jax.random.uniform(keys[2 * i], (fan_in, fan_out),
                               minval=-bound, maxval=bound, dtype=jnp.float32)
        b = jax.random.uniform(keys[2 * i + 1], (fan_out,),
                               minval=-bound, maxval=bound, dtype=jnp.float32)
        params += [w, b]
    return tuple(params)


def _reference_mixed_precision(emb, edge_index, params):
    """Pure-JAX reference mimicking the kernel's bf16-operand / f32-accum math."""
    w1, b1, w2, b2, w3, b3 = params
    col, row = edge_index[0], edge_index[1]
    emb_bf = emb.astype(jnp.bfloat16)
    f12 = jnp.concatenate([emb_bf[col], emb_bf[row]], axis=-1)
    h1 = jnp.dot(f12, w1.astype(jnp.bfloat16),
                 preferred_element_type=jnp.float32) + b1
    h1 = jnp.maximum(h1, 0.0)
    h2 = jnp.dot(h1.astype(jnp.bfloat16), w2.astype(jnp.bfloat16),
                 preferred_element_type=jnp.float32) + b2
    h2 = jnp.maximum(h2, 0.0)
    return h2 @ w3 + b3


def _reference_fp32(emb, edge_index, params):
    """Full-precision reference (same math as the PyTorch module, norm-free)."""
    w1, b1, w2, b2, w3, b3 = params
    col, row = edge_index[0], edge_index[1]
    f12 = jnp.concatenate([emb[col], emb[row]], axis=-1)
    h1 = jnp.maximum(f12 @ w1 + b1, 0.0)
    h2 = jnp.maximum(h1 @ w2 + b2, 0.0)
    return h2 @ w3 + b3


if __name__ == "__main__":
    key = jax.random.PRNGKey(0)
    k_emb, k_edge1, k_edge2, k_par = jax.random.split(key, 4)

    H = 32          # hidden_size
    N = 64          # nodes
    emb = jax.random.normal(k_emb, (N, H), dtype=jnp.float32)
    # two graphs: first half of nodes -> graph 0, second half -> graph 1
    batch = jnp.concatenate(
        [jnp.zeros(N // 2, jnp.int32), jnp.ones(N - N // 2, jnp.int32)])
    params = init_params(k_par, H)

    # E=500 exercises the single-step / small-tile path (grid=1),
    # E=5000 exercises padding + multi-step grid (tile_rows=8, grid=3).
    for E, k_edge in ((500, k_edge1), (5000, k_edge2)):
        edge_index = jax.random.randint(k_edge, (2, E), 0, N, dtype=jnp.int32)

        att_log_logits = extractor_mlp_forward(emb, edge_index, batch, params)
        att_log_logits = jax.block_until_ready(att_log_logits)

        ref_mixed = _reference_mixed_precision(emb, edge_index, params)
        ref_fp32 = _reference_fp32(emb, edge_index, params)

        assert att_log_logits.shape == (E, 1)
        assert jnp.allclose(att_log_logits, ref_mixed, atol=2e-3, rtol=2e-3)
        assert jnp.allclose(att_log_logits, ref_fp32, atol=1e-1, rtol=1e-1)

    print("KERNEL_OK")
</pallas_src>

<mosaic_0001>
module attributes {stable_mosaic.version = 11 : i64} {
  func.func @_extractor_mlp_kernel(%arg0: i32, %arg1: memref<512x64xbf16, #tpu.memory_space<vmem>>, %arg2: memref<64x128xbf16, #tpu.memory_space<vmem>>, %arg3: memref<1x128xf32, #tpu.memory_space<vmem>>, %arg4: memref<128x32xbf16, #tpu.memory_space<vmem>>, %arg5: memref<1x32xf32, #tpu.memory_space<vmem>>, %arg6: memref<1x32xf32, #tpu.memory_space<vmem>>, %arg7: memref<1xf32, #tpu.memory_space<smem>>, %arg8: memref<2x256xf32, #tpu.memory_space<vmem>>) attributes {dimension_semantics = [#tpu.dimension_semantics<parallel>], iteration_bounds = array<i64: 1>, scalar_prefetch = 0 : i64, scratch_operands = 0 : i64, tpu.core_type = #tpu.core_type<tc>, window_params = [{transform_indices = @transform_0, window_bounds = array<i64: 512, 64>}, {pipeline_mode = #tpu.pipeline_mode<synchronous>, transform_indices = @transform_1, window_bounds = array<i64: 64, 128>}, {pipeline_mode = #tpu.pipeline_mode<synchronous>, transform_indices = @transform_2, window_bounds = array<i64: 1, 128>}, {pipeline_mode = #tpu.pipeline_mode<synchronous>, transform_indices = @transform_3, window_bounds = array<i64: 128, 32>}, {pipeline_mode = #tpu.pipeline_mode<synchronous>, transform_indices = @transform_4, window_bounds = array<i64: 1, 32>}, {pipeline_mode = #tpu.pipeline_mode<synchronous>, transform_indices = @transform_5, window_bounds = array<i64: 1, 32>}, {transform_indices = @transform_6, window_bounds = array<i64: 1>}, {transform_indices = @transform_7, window_bounds = array<i64: 2, 256>}]} {
    %c0 = arith.constant 0 : index
    %c0_0 = arith.constant 0 : index
    %0 = vector.load %arg2[%c0, %c0_0] : memref<64x128xbf16, #tpu.memory_space<vmem>>, vector<64x128xbf16>
    %c0_1 = arith.constant 0 : index
    %c0_2 = arith.constant 0 : index
    %1 = vector.load %arg4[%c0_1, %c0_2] : memref<128x32xbf16, #tpu.memory_space<vmem>>, vector<128x32xbf16>
    %c0_3 = arith.constant 0 : index
    %c0_4 = arith.constant 0 : index
    %2 = vector.load %arg3[%c0_3, %c0_4] : memref<1x128xf32, #tpu.memory_space<vmem>>, vector<1x128xf32>
    %c0_5 = arith.constant 0 : index
    %c0_6 = arith.constant 0 : index
    %3 = vector.load %arg5[%c0_5, %c0_6] : memref<1x32xf32, #tpu.memory_space<vmem>>, vector<1x32xf32>
    %c0_7 = arith.constant 0 : index
    %c0_8 = arith.constant 0 : index
    %4 = vector.load %arg6[%c0_7, %c0_8] : memref<1x32xf32, #tpu.memory_space<vmem>>, vector<1x32xf32>
    %c0_9 = arith.constant 0 : index
    %5 = memref.load %arg7[%c0_9] : memref<1xf32, #tpu.memory_space<smem>>
    %c0_i32 = arith.constant 0 : i32
    %c256_i32 = arith.constant 256 : i32
    %6 = arith.muli %c0_i32, %c256_i32 : i32
    %7 = tpu.assume_multiple %6, 256 : i32
    %8 = arith.index_cast %7 : i32 to index
    %c0_10 = arith.constant 0 : index
    %9 = vector.load %arg1[%8, %c0_10] : memref<512x64xbf16, #tpu.memory_space<vmem>>, vector<256x64xbf16>
    %cst = arith.constant dense<0.000000e+00> : vector<256x128xf32>
    %10 = tpu.matmul %9, %0, %cst {dimension_numbers = #tpu.dot_dimension_numbers<[1], [0], [0], [1], [0, 0, 1, 1], [], []>} : vector<256x64xbf16>, vector<64x128xbf16>, vector<256x128xf32> -> vector<256x128xf32>
    %11 = vector.broadcast %2 : vector<1x128xf32> to vector<256x128xf32>
    %12 = arith.addf %10, %11 : vector<256x128xf32>
    %cst_11 = arith.constant 0.000000e+00 : f32
    %13 = vector.broadcast %cst_11 : f32 to vector<256x128xf32>
    %14 = arith.maximumf %12, %13 : vector<256x128xf32>
    %15 = arith.truncf %14 : vector<256x128xf32> to vector<256x128xbf16>
    %cst_12 = arith.constant dense<0.000000e+00> : vector<256x32xf32>
    %16 = tpu.matmul %15, %1, %cst_12 {dimension_numbers = #tpu.dot_dimension_numbers<[1], [0], [0], [1], [0, 0, 1, 1], [], []>} : vector<256x128xbf16>, vector<128x32xbf16>, vector<256x32xf32> -> vector<256x32xf32>
    %17 = vector.broadcast %3 : vector<1x32xf32> to vector<256x32xf32>
    %18 = arith.addf %16, %17 : vector<256x32xf32>
    %cst_13 = arith.constant 0.000000e+00 : f32
    %19 = vector.broadcast %cst_13 : f32 to vector<256x32xf32>
    %20 = arith.maximumf %18, %19 : vector<256x32xf32>
    %cst_14 = arith.constant dense<0.000000e+00> : vector<1x256xf32>
    %21 = tpu.matmul %4, %20, %cst_14 {dimension_numbers = #tpu.dot_dimension_numbers<[1], [1], [0], [0], [0, 0, 1, 0], [], []>} : vector<1x32xf32>, vector<256x32xf32>, vector<1x256xf32> -> vector<1x256xf32>
    %22 = vector.broadcast %5 : f32 to vector<1x256xf32>
    %23 = arith.addf %21, %22 : vector<1x256xf32>
    %24 = arith.index_cast %c0_i32 : i32 to index
    %c0_15 = arith.constant 0 : index
    %25 = vector.load %arg8[%24, %c0_15] : memref<2x256xf32, #tpu.memory_space<vmem>>, vector<1x256xf32>
    tpu.vector_store %arg8[%24, %c0_15], %23 {strides = array<i32>} : memref<2x256xf32, #tpu.memory_space<vmem>>, vector<1x256xf32>,
    %c1_i32 = arith.constant 1 : i32
    %c256_i32_16 = arith.constant 256 : i32
    %26 = arith.muli %c1_i32, %c256_i32_16 : i32
    %27 = tpu.assume_multiple %26, 256 : i32
    %28 = arith.index_cast %27 : i32 to index
    %c0_17 = arith.constant 0 : index
    %29 = vector.load %arg1[%28, %c0_17] : memref<512x64xbf16, #tpu.memory_space<vmem>>, vector<256x64xbf16>
    %cst_18 = arith.constant dense<0.000000e+00> : vector<256x128xf32>
    %30 = tpu.matmul %29, %0, %cst_18 {dimension_numbers = #tpu.dot_dimension_numbers<[1], [0], [0], [1], [0, 0, 1, 1], [], []>} : vector<256x64xbf16>, vector<64x128xbf16>, vector<256x128xf32> -> vector<256x128xf32>
    %31 = vector.broadcast %2 : vector<1x128xf32> to vector<256x128xf32>
    %32 = arith.addf %30, %31 : vector<256x128xf32>
    %cst_19 = arith.constant 0.000000e+00 : f32
    %33 = vector.broadcast %cst_19 : f32 to vector<256x128xf32>
    %34 = arith.maximumf %32, %33 : vector<256x128xf32>
    %35 = arith.truncf %34 : vector<256x128xf32> to vector<256x128xbf16>
    %cst_20 = arith.constant dense<0.000000e+00> : vector<256x32xf32>
    %36 = tpu.matmul %35, %1, %cst_20 {dimension_numbers = #tpu.dot_dimension_numbers<[1], [0], [0], [1], [0, 0, 1, 1], [], []>} : vector<256x128xbf16>, vector<128x32xbf16>, vector<256x32xf32> -> vector<256x32xf32>
    %37 = vector.broadcast %3 : vector<1x32xf32> to vector<256x32xf32>
    %38 = arith.addf %36, %37 : vector<256x32xf32>
    %cst_21 = arith.constant 0.000000e+00 : f32
    %39 = vector.broadcast %cst_21 : f32 to vector<256x32xf32>
    %40 = arith.maximumf %38, %39 : vector<256x32xf32>
    %cst_22 = arith.constant dense<0.000000e+00> : vector<1x256xf32>
    %41 = tpu.matmul %4, %40, %cst_22 {dimension_numbers = #tpu.dot_dimension_numbers<[1], [1], [0], [0], [0, 0, 1, 0], [], []>} : vector<1x32xf32>, vector<256x32xf32>, vector<1x256xf32> -> vector<1x256xf32>
    %42 = vector.broadcast %5 : f32 to vector<1x256xf32>
    %43 = arith.addf %41, %42 : vector<1x256xf32>
    %44 = arith.index_cast %c1_i32 : i32 to index
    %c0_23 = arith.constant 0 : index
    %45 = vector.load %arg8[%44, %c0_23] : memref<2x256xf32, #tpu.memory_space<vmem>>, vector<1x256xf32>
    tpu.vector_store %arg8[%44, %c0_23], %43 {strides = array<i32>} : memref<2x256xf32, #tpu.memory_space<vmem>>, vector<1x256xf32>,
    %c2_i32 = arith.constant 2 : i32
    return
  }
  func.func @transform_0(%arg0: i32) -> (i32, i32) {
    %c0_i32 = arith.constant 0 : i32
    %c0_i32_0 = arith.constant 0 : i32
    return %arg0, %c0_i32 : i32, i32
  }
  func.func @transform_1(%arg0: i32) -> (i32, i32) {
    %c0_i32 = arith.constant 0 : i32
    %c0_i32_0 = arith.constant 0 : i32
    %c0_i32_1 = arith.constant 0 : i32
    return %c0_i32, %c0_i32_0 : i32, i32
  }
  func.func @transform_2(%arg0: i32) -> (i32, i32) {
    %c0_i32 = arith.constant 0 : i32
    %c0_i32_0 = arith.constant 0 : i32
    %c0_i32_1 = arith.constant 0 : i32
    return %c0_i32, %c0_i32_0 : i32, i32
  }
  func.func @transform_3(%arg0: i32) -> (i32, i32) {
    %c0_i32 = arith.constant 0 : i32
    %c0_i32_0 = arith.constant 0 : i32
    %c0_i32_1 = arith.constant 0 : i32
    return %c0_i32, %c0_i32_0 : i32, i32
  }
  func.func @transform_4(%arg0: i32) -> (i32, i32) {
    %c0_i32 = arith.constant 0 : i32
    %c0_i32_0 = arith.constant 0 : i32
    %c0_i32_1 = arith.constant 0 : i32
    return %c0_i32, %c0_i32_0 : i32, i32
  }
  func.func @transform_5(%arg0: i32) -> (i32, i32) {
    %c0_i32 = arith.constant 0 : i32
    %c0_i32_0 = arith.constant 0 : i32
    %c0_i32_1 = arith.constant 0 : i32
    return %c0_i32, %c0_i32_0 : i32, i32
  }
  func.func @transform_6(%arg0: i32) -> i32 {
    %c0_i32 = arith.constant 0 : i32
    %c0_i32_0 = arith.constant 0 : i32
    return %c0_i32 : i32
  }
  func.func @transform_7(%arg0: i32) -> (i32, i32) {
    %c0_i32 = arith.constant 0 : i32
    %c0_i32_0 = arith.constant 0 : i32
    return %arg0, %c0_i32 : i32, i32
  }
}

</mosaic_0001>

<llo_original>
// kernel: extractor_mlp_forward.1
$region0: #{extractor_mlp_forward.1}
  #allocation0 [shape = 'u32[]', space=smem, size = 0x4, offset = 0x4, fixed_abs, tag = 'smem constant byte address 0x4 - core index']
  #allocation1 [shape = 'u32[144,128]{1,0:T(1,128)}', space=vmem, size = 0x12000, scoped, tag = 'internal scratch']
  #allocation2 [shape = 'f32[1]{0:T(128)S(6)}', space=smem, size = 0x200, scoped, tag = 'scoped memory for extractor_mlp_forward.1']
  %s0 = inlined_call_operand.vmem [shape: bf16[512,64], index: 0, kind: input, shape index: {}]
  %s1 = inlined_call_operand.vmem [shape: bf16[64,128], index: 1, kind: input, shape index: {}]
  %s2 = inlined_call_operand.vmem [shape: f32[1,128], index: 2, kind: input, shape index: {}]
  %s3 = inlined_call_operand.vmem [shape: bf16[128,32], index: 3, kind: input, shape index: {}]
  %s4 = inlined_call_operand.vmem [shape: f32[1,32], index: 4, kind: input, shape index: {}]
  %s5 = inlined_call_operand.vmem [shape: f32[1,32], index: 5, kind: input, shape index: {}]
  %s6 = inlined_call_operand.<no memory space> [shape: f32[1], index: 6, kind: input, shape index: {}]
  %s7 = inlined_call_operand.vmem [shape: f32[2,256], index: 7, kind: output, shape index: {}]
  %s8 = sld [smem:[#allocation0]]
  $region38: #{extractor_mlp_forward.1} parent=0
    _
  %s10 = ssub.s32 1, %s8
  %s11 = scalar_select 0, %s10, %s8
  %12 = sst [smem:[#allocation2]] %s6
  // Predicated region
  $region2: #{extractor_mlp_forward.1} parent=0 // pred_check
    _
  $region3: #{extractor_mlp_forward.1} parent=0 // pred_check_branch
    %14 = sbr.rel (0) target = $region5
  $region4: #{extractor_mlp_forward.1} parent=0 // pred_region
    _
  $region5: #{extractor_mlp_forward.1} parent=0 // pred_fallthru
    _
  // Predicated region
  $region6: #{extractor_mlp_forward.1} parent=0 // pred_check
    _
  $region7: #{extractor_mlp_forward.1} parent=0 // pred_check_branch
    %16 = sbr.rel (0) target = $region9
  $region8: #{extractor_mlp_forward.1} parent=0 // pred_region
    _
  $region9: #{extractor_mlp_forward.1} parent=0 // pred_fallthru
    _
  // Predicated region
  $region10: #{extractor_mlp_forward.1} parent=0 // pred_check
    _
  $region11: #{extractor_mlp_forward.1} parent=0 // pred_check_branch
    %18 = sbr.rel (0) target = $region13
  $region12: #{extractor_mlp_forward.1} parent=0 // pred_region
    _
  $region13: #{extractor_mlp_forward.1} parent=0 // pred_fallthru
    _
  // Predicated region
  $region14: #{extractor_mlp_forward.1} parent=0 // pred_check
    _
  $region15: #{extractor_mlp_forward.1} parent=0 // pred_check_branch
    %20 = sbr.rel (0) target = $region17
  $region16: #{extractor_mlp_forward.1} parent=0 // pred_region
    _
  $region17: #{extractor_mlp_forward.1} parent=0 // pred_fallthru
    _
  // Predicated region
  $region18: #{extractor_mlp_forward.1} parent=0 // pred_check
    _
  $region19: #{extractor_mlp_forward.1} parent=0 // pred_check_branch
    %22 = sbr.rel (0) target = $region21
  $region20: #{extractor_mlp_forward.1} parent=0 // pred_region
    _
  $region21: #{extractor_mlp_forward.1} parent=0 // pred_fallthru
    _
  // Predicated region
  $region22: #{extractor_mlp_forward.1} parent=0 // pred_check
    _
  $region23: #{extractor_mlp_forward.1} parent=0 // pred_check_branch
    %24 = sbr.rel (0) target = $region25
  $region24: #{extractor_mlp_forward.1} parent=0 // pred_region
    _
  $region25: #{extractor_mlp_forward.1} parent=0 // pred_fallthru
    _
  // Predicated region
  $region26: #{extractor_mlp_forward.1} parent=0 // pred_check
    _
  $region27: #{extractor_mlp_forward.1} parent=0 // pred_check_branch
    %26 = sbr.rel (0) target = $region29
  $region28: #{extractor_mlp_forward.1} parent=0 // pred_region
    _
  $region29: #{extractor_mlp_forward.1} parent=0 // pred_fallthru
    _
  %v28 = vld [vmem:[%s1] sm:$0xf]
  %v29 = vld [vmem:[%s1 + $0x4] sm:$0xf]
  %v30 = vld [vmem:[%s1 + $0x8] sm:$0xf]
  %v31 = vld [vmem:[%s1 + $0xc] sm:$0xf]
  %v32 = vld [vmem:[%s1 + $0x10] sm:$0xf]
  %v33 = vld [vmem:[%s1 + $0x14] sm:$0xf]
  %v34 = vld [vmem:[%s1 + $0x18] sm:$0xf]
  %v35 = vld [vmem:[%s1 + $0x1c] sm:$0xf]
  %v36 = vld [vmem:[%s3] sm:$0xf]
  %v37 = vld [vmem:[%s3 + $0x4] sm:$0xf]
  %v38 = vld [vmem:[%s3 + $0x8] sm:$0xf]
  %v39 = vld [vmem:[%s3 + $0xc] sm:$0xf]
  %v40 = vld [vmem:[%s3 + $0x10] sm:$0xf]
  %v41 = vld [vmem:[%s3 + $0x14] sm:$0xf]
  %v42 = vld [vmem:[%s3 + $0x18] sm:$0xf]
  %v43 = vld [vmem:[%s3 + $0x1c] sm:$0xf]
  %v44 = vld [vmem:[%s3 + $0x20] sm:$0xf]
  %v45 = vld [vmem:[%s3 + $0x24] sm:$0xf]
  %v46 = vld [vmem:[%s3 + $0x28] sm:$0xf]
  %v47 = vld [vmem:[%s3 + $0x2c] sm:$0xf]
  %v48 = vld [vmem:[%s3 + $0x30] sm:$0xf]
  %v49 = vld [vmem:[%s3 + $0x34] sm:$0xf]
  %v50 = vld [vmem:[%s3 + $0x38] sm:$0xf]
  %v51 = vld [vmem:[%s3 + $0x3c] sm:$0xf]
  %v52 = vld [vmem:[%s2] sm:$0x1]
  %v53 = vld [vmem:[%s4] sm:$0x1]
  %v54 = vld [vmem:[%s5] sm:$0x1]
  %s55 = sld [smem:[#allocation2]]
  %v56 = vld [vmem:[%s0] sm:$0xf]
  %v57 = vld [vmem:[%s0 + $0x4] sm:$0xf]
  %v58 = vld [vmem:[%s0 + $0x8] sm:$0xf]
  %v59 = vld [vmem:[%s0 + $0xc] sm:$0xf]
  %v60 = vld [vmem:[%s0 + $0x10] sm:$0xf]
  %v61 = vld [vmem:[%s0 + $0x14] sm:$0xf]
  %v62 = vld [vmem:[%s0 + $0x18] sm:$0xf]
  %v63 = vld [vmem:[%s0 + $0x1c] sm:$0xf]
  %v64 = vld [vmem:[%s0 + $0x20] sm:$0xf]
  %v65 = vld [vmem:[%s0 + $0x24] sm:$0xf]
  %v66 = vld [vmem:[%s0 + $0x28] sm:$0xf]
  %v67 = vld [vmem:[%s0 + $0x2c] sm:$0xf]
  %v68 = vld [vmem:[%s0 + $0x30] sm:$0xf]
  %v69 = vld [vmem:[%s0 + $0x34] sm:$0xf]
  %v70 = vld [vmem:[%s0 + $0x38] sm:$0xf]
  %v71 = vld [vmem:[%s0 + $0x3c] sm:$0xf]
  %v72 = vld [vmem:[%s0 + $0x40] sm:$0xf]
  %v73 = vld [vmem:[%s0 + $0x44] sm:$0xf]
  %v74 = vld [vmem:[%s0 + $0x48] sm:$0xf]
  %v75 = vld [vmem:[%s0 + $0x4c] sm:$0xf]
  %v76 = vld [vmem:[%s0 + $0x50] sm:$0xf]
  %v77 = vld [vmem:[%s0 + $0x54] sm:$0xf]
  %v78 = vld [vmem:[%s0 + $0x58] sm:$0xf]
  %v79 = vld [vmem:[%s0 + $0x5c] sm:$0xf]
  %v80 = vld [vmem:[%s0 + $0x60] sm:$0xf]
  %v81 = vld [vmem:[%s0 + $0x64] sm:$0xf]
  %v82 = vld [vmem:[%s0 + $0x68] sm:$0xf]
  %v83 = vld [vmem:[%s0 + $0x6c] sm:$0xf]
  %v84 = vld [vmem:[%s0 + $0x70] sm:$0xf]
  %v85 = vld [vmem:[%s0 + $0x74] sm:$0xf]
  %v86 = vld [vmem:[%s0 + $0x78] sm:$0xf]
  %v87 = vld [vmem:[%s0 + $0x7c] sm:$0xf]
  %v89 = vlaneseq
  %v90 = vshrl.u32 %v89, 7
  %v91 = vsub.s32 0, %v90
  %v92 = vrot.slane %v52, %v91
  %v126 = vunpack.c.l.b16 %v56
  %v127 = vunpack.c.l.b16 %v57
  %v128 = vunpack.c.l.b16 %v58
  %v129 = vunpack.c.l.b16 %v59
  %v130 = vunpack.c.l.b16 %v60
  %v131 = vunpack.c.l.b16 %v61
  %v132 = vunpack.c.l.b16 %v62
  %v133 = vunpack.c.l.b16 %v63
  %v134 = vunpack.c.l.b16 %v64
  %v135 = vunpack.c.l.b16 %v65
  %v136 = vunpack.c.l.b16 %v66
  %v137 = vunpack.c.l.b16 %v67
  %v138 = vunpack.c.l.b16 %v68
  %v139 = vunpack.c.l.b16 %v69
  %v140 = vunpack.c.l.b16 %v70
  %v141 = vunpack.c.l.b16 %v71
  %v142 = vunpack.c.l.b16 %v72
  %v143 = vunpack.c.l.b16 %v73
  %v144 = vunpack.c.l.b16 %v74
  %v145 = vunpack.c.l.b16 %v75
  %v146 = vunpack.c.l.b16 %v76
  %v147 = vunpack.c.l.b16 %v77
  %v148 = vunpack.c.l.b16 %v78
  %v149 = vunpack.c.l.b16 %v79
  %v150 = vunpack.c.l.b16 %v80
  %v151 = vunpack.c.l.b16 %v81
  %v152 = vunpack.c.l.b16 %v82
  %v153 = vunpack.c.l.b16 %v83
  %v154 = vunpack.c.l.b16 %v84
  %v155 = vunpack.c.l.b16 %v85
  %v156 = vunpack.c.l.b16 %v86
  %v157 = vunpack.c.l.b16 %v87
  %v158 = vpack.c.b16 %v127, %v126
  %v159 = vpack.c.b16 %v129, %v128
  %v160 = vpack.c.b16 %v131, %v130
  %v161 = vpack.c.b16 %v133, %v132
  %v162 = vpack.c.b16 %v135, %v134
  %v163 = vpack.c.b16 %v137, %v136
  %v164 = vpack.c.b16 %v139, %v138
  %v165 = vpack.c.b16 %v141, %v140
  %v166 = vpack.c.b16 %v143, %v142
  %v167 = vpack.c.b16 %v145, %v144
  %v168 = vpack.c.b16 %v147, %v146
  %v169 = vpack.c.b16 %v149, %v148
  %v170 = vpack.c.b16 %v151, %v150
  %v171 = vpack.c.b16 %v153, %v152
  %v172 = vpack.c.b16 %v155, %v154
  %v173 = vpack.c.b16 %v157, %v156
  %v182 = vunpack.c.l.b16 %v28
  %v183 = vunpack.c.l.b16 %v29
  %v184 = vunpack.c.l.b16 %v30
  %v185 = vunpack.c.l.b16 %v31
  %v186 = vunpack.c.l.b16 %v32
  %v187 = vunpack.c.l.b16 %v33
  %v188 = vunpack.c.l.b16 %v34
  %v189 = vunpack.c.l.b16 %v35
  %v190 = vpack.c.b16 %v183, %v182
  %v191 = vpack.c.b16 %v185, %v184
  %v192 = vpack.c.b16 %v187, %v186
  %v193 = vpack.c.b16 %v189, %v188
  %vm198 = vcmask 523264
  %v200 = vsel %vm198, %v158, 0
  %v203 = vsel %vm198, %v159, 0
  %v206 = vsel %vm198, %v160, 0
  %v209 = vsel %vm198, %v161, 0
  %v212 = vsel %vm198, %v162, 0
  %v215 = vsel %vm198, %v163, 0
  %v218 = vsel %vm198, %v164, 0
  %v221 = vsel %vm198, %v165, 0
  %v224 = vsel %vm198, %v166, 0
  %v227 = vsel %vm198, %v167, 0
  %v230 = vsel %vm198, %v168, 0
  %v233 = vsel %vm198, %v169, 0
  %v236 = vsel %vm198, %v170, 0
  %v239 = vsel %vm198, %v171, 0
  %v242 = vsel %vm198, %v172, 0
  %v245 = vsel %vm198, %v173, 0
  %247 = vmatprep.subr.bf16.mxu0 0
  %248 = vmatpush1.bf16.msra.mxu0 %v190
  %249 = vmatprep.subr.bf16.mxu0 0
  %250 = vmatpush1.bf16.msra.mxu0 %v191
  %251 = vmatprep.subr.bf16.mxu0 0
  %252 = vmatpush1.bf16.msra.mxu0 %v192
  %253 = vmatprep.subr.bf16.mxu0 0
  %254 = vmatpush1.bf16.msra.mxu0 %v193
  %255 = vmatprep.subr.bf16.mxu0 0
  %256 = vmatpush1.bf16.msra.mxu0 0
  %257 = vmatprep.subr.bf16.mxu0 0
  %258 = vmatpush1.bf16.msra.mxu0 0
  %259 = vmatprep.subr.bf16.mxu0 0
  %260 = vmatpush1.bf16.msra.mxu0 0
  %261 = vmatprep.subr.bf16.mxu0 0
  %262 = vmatpush1.bf16.msra.mxu0 0
  %263 = vmatprep.subr.bf16.mxu0 0
  %264 = vmatpush1.bf16.msra.mxu0 0
  %265 = vmatprep.subr.bf16.mxu0 0
  %266 = vmatpush1.bf16.msra.mxu0 0
  %267 = vmatprep.subr.bf16.mxu0 0
  %268 = vmatpush1.bf16.msra.mxu0 0
  %269 = vmatprep.subr.bf16.mxu0 0
  %270 = vmatpush1.bf16.msra.mxu0 0
  %271 = vmatprep.subr.bf16.mxu0 0
  %272 = vmatpush1.bf16.msra.mxu0 0
  %273 = vmatprep.subr.bf16.mxu0 0
  %274 = vmatpush1.bf16.msra.mxu0 0
  %275 = vmatprep.subr.bf16.mxu0 0
  %276 = vmatpush1.bf16.msra.mxu0 0
  %277 = vmatprep.subr.bf16.mxu0 0
  %278 = vmatpush1.bf16.msra.mxu0 0
  %279 = vmatprep.mubr.bf16.mxu0 0
  %280 = vmatmul.mubr.bf16.gmra.mrb[0].mxu0 %v200
  %v281 = vpop.f32.mrb[0].mxu0
  %v282 = vadd.f32 %v92, %v281
  %v283 = vpop.f32.mrb[0].mxu0
  %v284 = vpop.f32.mrb[0].mxu0
  %v285 = vadd.f32 %v92, %v284
  %v286 = vpop.f32.mrb[0].mxu0
  %287 = vmatprep.mubr.bf16.mxu0 0
  %288 = vmatmul.mubr.bf16.gmra.mrb[0].mxu0 %v203
  %v289 = vpop.f32.mrb[0].mxu0
  %v290 = vadd.f32 %v92, %v289
  %v291 = vpop.f32.mrb[0].mxu0
  %v292 = vpop.f32.mrb[0].mxu0
  %v293 = vadd.f32 %v92, %v292
  %v294 = vpop.f32.mrb[0].mxu0
  %295 = vmatprep.mubr.bf16.mxu0 0
  %296 = vmatmul.mubr.bf16.gmra.mrb[0].mxu0 %v206
  %v297 = vpop.f32.mrb[0].mxu0
  %v298 = vadd.f32 %v92, %v297
  %v299 = vpop.f32.mrb[0].mxu0
  %v300 = vpop.f32.mrb[0].mxu0
  %v301 = vadd.f32 %v92, %v300
  %v302 = vpop.f32.mrb[0].mxu0
  %303 = vmatprep.mubr.bf16.mxu0 0
  %304 = vmatmul.mubr.bf16.gmra.mrb[0].mxu0 %v209
  %v305 = vpop.f32.mrb[0].mxu0
  %v306 = vadd.f32 %v92, %v305
  %v307 = vpop.f32.mrb[0].mxu0
  %v308 = vpop.f32.mrb[0].mxu0
  %v309 = vadd.f32 %v92, %v308
  %v310 = vpop.f32.mrb[0].mxu0
  %311 = vmatprep.mubr.bf16.mxu0 0
  %312 = vmatmul.mubr.bf16.gmra.mrb[0].mxu0 %v212
  %v313 = vpop.f32.mrb[0].mxu0
  %v314 = vadd.f32 %v92, %v313
  %v315 = vpop.f32.mrb[0].mxu0
  %v316 = vpop.f32.mrb[0].mxu0
  %v317 = vadd.f32 %v92, %v316
  %v318 = vpop.f32.mrb[0].mxu0
  %319 = vmatprep.mubr.bf16.mxu0 0
  %320 = vmatmul.mubr.bf16.gmra.mrb[0].mxu0 %v215
  %v321 = vpop.f32.mrb[0].mxu0
  %v322 = vadd.f32 %v92, %v321
  %v323 = vpop.f32.mrb[0].mxu0
  %v324 = vpop.f32.mrb[0].mxu0
  %v325 = vadd.f32 %v92, %v324
  %v326 = vpop.f32.mrb[0].mxu0
  %327 = vmatprep.mubr.bf16.mxu0 0
  %328 = vmatmul.mubr.bf16.gmra.mrb[0].mxu0 %v218
  %v329 = vpop.f32.mrb[0].mxu0
  %v330 = vadd.f32 %v92, %v329
  %v331 = vpop.f32.mrb[0].mxu0
  %v332 = vpop.f32.mrb[0].mxu0
  %v333 = vadd.f32 %v92, %v332
  %v334 = vpop.f32.mrb[0].mxu0
  %335 = vmatprep.mubr.bf16.mxu0 0
  %336 = vmatmul.mubr.bf16.gmra.mrb[0].mxu0 %v221
  %v337 = vpop.f32.mrb[0].mxu0
  %v338 = vadd.f32 %v92, %v337
  %v339 = vpop.f32.mrb[0].mxu0
  %v340 = vpop.f32.mrb[0].mxu0
  %v341 = vadd.f32 %v92, %v340
  %v342 = vpop.f32.mrb[0].mxu0
  %343 = vmatprep.mubr.bf16.mxu0 0
  %344 = vmatmul.mubr.bf16.gmra.mrb[0].mxu0 %v224
  %v345 = vpop.f32.mrb[0].mxu0
  %v346 = vadd.f32 %v92, %v345
  %v347 = vpop.f32.mrb[0].mxu0
  %v348 = vpop.f32.mrb[0].mxu0
  %v349 = vadd.f32 %v92, %v348
  %v350 = vpop.f32.mrb[0].mxu0
  %351 = vmatprep.mubr.bf16.mxu0 0
  %352 = vmatmul.mubr.bf16.gmra.mrb[0].mxu0 %v227
  %v353 = vpop.f32.mrb[0].mxu0
  %v354 = vadd.f32 %v92, %v353
  %v355 = vpop.f32.mrb[0].mxu0
  %v356 = vpop.f32.mrb[0].mxu0
  %v357 = vadd.f32 %v92, %v356
  %v358 = vpop.f32.mrb[0].mxu0
  %359 = vmatprep.mubr.bf16.mxu0 0
  %360 = vmatmul.mubr.bf16.gmra.mrb[0].mxu0 %v230
  %v361 = vpop.f32.mrb[0].mxu0
  %v362 = vadd.f32 %v92, %v361
  %v363 = vpop.f32.mrb[0].mxu0
  %v364 = vpop.f32.mrb[0].mxu0
  %v365 = vadd.f32 %v92, %v364
  %v366 = vpop.f32.mrb[0].mxu0
  %367 = vmatprep.mubr.bf16.mxu0 0
  %368 = vmatmul.mubr.bf16.gmra.mrb[0].mxu0 %v233
  %v369 = vpop.f32.mrb[0].mxu0
  %v370 = vadd.f32 %v92, %v369
  %v371 = vpop.f32.mrb[0].mxu0
  %v372 = vpop.f32.mrb[0].mxu0
  %v373 = vadd.f32 %v92, %v372
  %v374 = vpop.f32.mrb[0].mxu0
  %375 = vmatprep.mubr.bf16.mxu0 0
  %376 = vmatmul.mubr.bf16.gmra.mrb[0].mxu0 %v236
  %v377 = vpop.f32.mrb[0].mxu0
  %v378 = vadd.f32 %v92, %v377
  %v379 = vpop.f32.mrb[0].mxu0
  %v380 = vpop.f32.mrb[0].mxu0
  %v381 = vadd.f32 %v92, %v380
  %v382 = vpop.f32.mrb[0].mxu0
  %383 = vmatprep.mubr.bf16.mxu0 0
  %384 = vmatmul.mubr.bf16.gmra.mrb[0].mxu0 %v239
  %v385 = vpop.f32.mrb[0].mxu0
  %v386 = vadd.f32 %v92, %v385
  %v387 = vpop.f32.mrb[0].mxu0
  %v388 = vpop.f32.mrb[0].mxu0
  %v389 = vadd.f32 %v92, %v388
  %v390 = vpop.f32.mrb[0].mxu0
  %391 = vmatprep.mubr.bf16.mxu0 0
  %392 = vmatmul.mubr.bf16.gmra.mrb[0].mxu0 %v242
  %v393 = vpop.f32.mrb[0].mxu0
  %v394 = vadd.f32 %v92, %v393
  %v395 = vpop.f32.mrb[0].mxu0
  %v396 = vpop.f32.mrb[0].mxu0
  %v397 = vadd.f32 %v92, %v396
  %v398 = vpop.f32.mrb[0].mxu0
  %399 = vmatprep.mubr.bf16.mxu0 0
  %400 = vmatmul.mubr.bf16.gmra.mrb[0].mxu0 %v245
  %v401 = vpop.f32.mrb[0].mxu0
  %v402 = vadd.f32 %v92, %v401
  %v403 = vpop.f32.mrb[0].mxu0
  %v404 = vpop.f32.mrb[0].mxu0
  %v405 = vadd.f32 %v92, %v404
  %v406 = vpop.f32.mrb[0].mxu0
  %407 = vdwg.mxu0
  %v408 = vmax.f32 %v282, 0.0
  %v409 = vmax.f32 %v285, 0.0
  %v410 = vmax.f32 %v290, 0.0
  %v411 = vmax.f32 %v293, 0.0
  %v412 = vmax.f32 %v298, 0.0
  %v413 = vmax.f32 %v301, 0.0
  %v414 = vmax.f32 %v306, 0.0
  %v415 = vmax.f32 %v309, 0.0
  %v416 = vmax.f32 %v314, 0.0
  %v417 = vmax.f32 %v317, 0.0
  %v418 = vmax.f32 %v322, 0.0
  %v419 = vmax.f32 %v325, 0.0
  %v420 = vmax.f32 %v330, 0.0
  %v421 = vmax.f32 %v333, 0.0
  %v422 = vmax.f32 %v338, 0.0
  %v423 = vmax.f32 %v341, 0.0
  %v424 = vmax.f32 %v346, 0.0
  %v425 = vmax.f32 %v349, 0.0
  %v426 = vmax.f32 %v354, 0.0
  %v427 = vmax.f32 %v357, 0.0
  %v428 = vmax.f32 %v362, 0.0
  %v429 = vmax.f32 %v365, 0.0
  %v430 = vmax.f32 %v370, 0.0
  %v431 = vmax.f32 %v373, 0.0
  %v432 = vmax.f32 %v378, 0.0
  %v433 = vmax.f32 %v381, 0.0
  %v434 = vmax.f32 %v386, 0.0
  %v435 = vmax.f32 %v389, 0.0
  %v436 = vmax.f32 %v394, 0.0
  %v437 = vmax.f32 %v397, 0.0
  %v438 = vmax.f32 %v402, 0.0
  %v439 = vmax.f32 %v405, 0.0
  %v440 = vpack.c.bf16 %v409, %v408
  %v441 = vpack.c.bf16 %v411, %v410
  %v442 = vpack.c.bf16 %v413, %v412
  %v443 = vpack.c.bf16 %v415, %v414
  %v444 = vpack.c.bf16 %v417, %v416
  %v445 = vpack.c.bf16 %v419, %v418
  %v446 = vpack.c.bf16 %v421, %v420
  %v447 = vpack.c.bf16 %v423, %v422
  %v448 = vpack.c.bf16 %v425, %v424
  %v449 = vpack.c.bf16 %v427, %v426
  %v450 = vpack.c.bf16 %v429, %v428
  %v451 = vpack.c.bf16 %v431, %v430
  %v452 = vpack.c.bf16 %v433, %v432
  %v453 = vpack.c.bf16 %v435, %v434
  %v454 = vpack.c.bf16 %v437, %v436
  %v455 = vpack.c.bf16 %v439, %v438
  %v457 = vlaneseq
  %v458 = vshrl.u32 %v457, 7
  %v459 = vsub.s32 0, %v458
  %v460 = vrot.slane %v53, %v459
  %v478 = vunpack.c.l.b16 %v36
  %v479 = vunpack.c.l.b16 %v37
  %v480 = vunpack.c.l.b16 %v38
  %v481 = vunpack.c.l.b16 %v39
  %v482 = vunpack.c.l.b16 %v40
  %v483 = vunpack.c.l.b16 %v41
  %v484 = vunpack.c.l.b16 %v42
  %v485 = vunpack.c.l.b16 %v43
  %v486 = vunpack.c.l.b16 %v44
  %v487 = vunpack.c.l.b16 %v45
  %v488 = vunpack.c.l.b16 %v46
  %v489 = vunpack.c.l.b16 %v47
  %v490 = vunpack.c.l.b16 %v48
  %v491 = vunpack.c.l.b16 %v49
  %v492 = vunpack.c.l.b16 %v50
  %v493 = vunpack.c.l.b16 %v51
  %v494 = vpack.c.b16 %v479, %v478
  %v495 = vpack.c.b16 %v481, %v480
  %v496 = vpack.c.b16 %v483, %v482
  %v497 = vpack.c.b16 %v485, %v484
  %v498 = vpack.c.b16 %v487, %v486
  %v499 = vpack.c.b16 %v489, %v488
  %v500 = vpack.c.b16 %v491, %v490
  %v501 = vpack.c.b16 %v493, %v492
  %510 = vmatprep.subr.bf16.mxu0 0
  %511 = vmatpush1.bf16.msra.mxu0 %v494
  %512 = vmatprep.subr.bf16.mxu0 0
  %513 = vmatpush1.bf16.msra.mxu0 %v495
  %514 = vmatprep.subr.bf16.mxu0 0
  %515 = vmatpush1.bf16.msra.mxu0 %v496
  %516 = vmatprep.subr.bf16.mxu0 0
  %517 = vmatpush1.bf16.msra.mxu0 %v497
  %518 = vmatprep.subr.bf16.mxu0 0
  %519 = vmatpush1.bf16.msra.mxu0 %v498
  %520 = vmatprep.subr.bf16.mxu0 0
  %521 = vmatpush1.bf16.msra.mxu0 %v499
  %522 = vmatprep.subr.bf16.mxu0 0
  %523 = vmatpush1.bf16.msra.mxu0 %v500
  %524 = vmatprep.subr.bf16.mxu0 0
  %525 = vmatpush1.bf16.msra.mxu0 %v501
  %526 = vmatprep.subr.bf16.mxu0 0
  %527 = vmatpush1.bf16.msra.mxu0 0
  %528 = vmatprep.subr.bf16.mxu0 0
  %529 = vmatpush1.bf16.msra.mxu0 0
  %530 = vmatprep.subr.bf16.mxu0 0
  %531 = vmatpush1.bf16.msra.mxu0 0
  %532 = vmatprep.subr.bf16.mxu0 0
  %533 = vmatpush1.bf16.msra.mxu0 0
  %534 = vmatprep.subr.bf16.mxu0 0
  %535 = vmatpush1.bf16.msra.mxu0 0
  %536 = vmatprep.subr.bf16.mxu0 0
  %537 = vmatpush1.bf16.msra.mxu0 0
  %538 = vmatprep.subr.bf16.mxu0 0
  %539 = vmatpush1.bf16.msra.mxu0 0
  %540 = vmatprep.subr.bf16.mxu0 0
  %541 = vmatpush1.bf16.msra.mxu0 0
  %542 = vmatprep.mubr.bf16.mxu0 0
  %543 = vmatmul.mubr.bf16.gmra.mrb[0].mxu0 %v440
  %v544 = vpop.f32.mrb[0].mxu0
  %v545 = vadd.f32 %v460, %v544
  %v546 = vpop.f32.mrb[0].mxu0
  %v547 = vpop.f32.mrb[0].mxu0
  %v548 = vadd.f32 %v460, %v547
  %v549 = vpop.f32.mrb[0].mxu0
  %550 = vmatprep.mubr.bf16.mxu0 0
  %551 = vmatmul.mubr.bf16.gmra.mrb[0].mxu0 %v441
  %v552 = vpop.f32.mrb[0].mxu0
  %v553 = vadd.f32 %v460, %v552
  %v554 = vpop.f32.mrb[0].mxu0
  %v555 = vpop.f32.mrb[0].mxu0
  %v556 = vadd.f32 %v460, %v555
  %v557 = vpop.f32.mrb[0].mxu0
  %558 = vmatprep.mubr.bf16.mxu0 0
  %559 = vmatmul.mubr.bf16.gmra.mrb[0].mxu0 %v442
  %v560 = vpop.f32.mrb[0].mxu0
  %v561 = vadd.f32 %v460, %v560
  %v562 = vpop.f32.mrb[0].mxu0
  %v563 = vpop.f32.mrb[0].mxu0
  %v564 = vadd.f32 %v460, %v563
  %v565 = vpop.f32.mrb[0].mxu0
  %566 = vmatprep.mubr.bf16.mxu0 0
  %567 = vmatmul.mubr.bf16.gmra.mrb[0].mxu0 %v443
  %v568 = vpop.f32.mrb[0].mxu0
  %v569 = vadd.f32 %v460, %v568
  %v570 = vpop.f32.mrb[0].mxu0
  %v571 = vpop.f32.mrb[0].mxu0
  %v572 = vadd.f32 %v460, %v571
  %v573 = vpop.f32.mrb[0].mxu0
  %574 = vmatprep.mubr.bf16.mxu0 0
  %575 = vmatmul.mubr.bf16.gmra.mrb[0].mxu0 %v444
  %v576 = vpop.f32.mrb[0].mxu0
  %v577 = vadd.f32 %v460, %v576
  %v578 = vpop.f32.mrb[0].mxu0
  %v579 = vpop.f32.mrb[0].mxu0
  %v580 = vadd.f32 %v460, %v579
  %v581 = vpop.f32.mrb[0].mxu0
  %582 = vmatprep.mubr.bf16.mxu0 0
  %583 = vmatmul.mubr.bf16.gmra.mrb[0].mxu0 %v445
  %v584 = vpop.f32.mrb[0].mxu0
  %v585 = vadd.f32 %v460, %v584
  %v586 = vpop.f32.mrb[0].mxu0
  %v587 = vpop.f32.mrb[0].mxu0
  %v588 = vadd.f32 %v460, %v587
  %v589 = vpop.f32.mrb[0].mxu0
  %590 = vmatprep.mubr.bf16.mxu0 0
  %591 = vmatmul.mubr.bf16.gmra.mrb[0].mxu0 %v446
  %v592 = vpop.f32.mrb[0].mxu0
  %v593 = vadd.f32 %v460, %v592
  %v594 = vpop.f32.mrb[0].mxu0
  %v595 = vpop.f32.mrb[0].mxu0
  %v596 = vadd.f32 %v460, %v595
  %v597 = vpop.f32.mrb[0].mxu0
  %598 = vmatprep.mubr.bf16.mxu0 0
  %599 = vmatmul.mubr.bf16.gmra.mrb[0].mxu0 %v447
  %v600 = vpop.f32.mrb[0].mxu0
  %v601 = vadd.f32 %v460, %v600
  %v602 = vpop.f32.mrb[0].mxu0
  %v603 = vpop.f32.mrb[0].mxu0
  %v604 = vadd.f32 %v460, %v603
  %v605 = vpop.f32.mrb[0].mxu0
  %606 = vmatprep.mubr.bf16.mxu0 0
  %607 = vmatmul.mubr.bf16.gmra.mrb[0].mxu0 %v448
  %v608 = vpop.f32.mrb[0].mxu0
  %v609 = vadd.f32 %v460, %v608
  %v610 = vpop.f32.mrb[0].mxu0
  %v611 = vpop.f32.mrb[0].mxu0
  %v612 = vadd.f32 %v460, %v611
  %v613 = vpop.f32.mrb[0].mxu0
  %614 = vmatprep.mubr.bf16.mxu0 0
  %615 = vmatmul.mubr.bf16.gmra.mrb[0].mxu0 %v449
  %v616 = vpop.f32.mrb[0].mxu0
  %v617 = vadd.f32 %v460, %v616
  %v618 = vpop.f32.mrb[0].mxu0
  %v619 = vpop.f32.mrb[0].mxu0
  %v620 = vadd.f32 %v460, %v619
  %v621 = vpop.f32.mrb[0].mxu0
  %622 = vmatprep.mubr.bf16.mxu0 0
  %623 = vmatmul.mubr.bf16.gmra.mrb[0].mxu0 %v450
  %v624 = vpop.f32.mrb[0].mxu0
  %v625 = vadd.f32 %v460, %v624
  %v626 = vpop.f32.mrb[0].mxu0
  %v627 = vpop.f32.mrb[0].mxu0
  %v628 = vadd.f32 %v460, %v627
  %v629 = vpop.f32.mrb[0].mxu0
  %630 = vmatprep.mubr.bf16.mxu0 0
  %631 = vmatmul.mubr.bf16.gmra.mrb[0].mxu0 %v451
  %v632 = vpop.f32.mrb[0].mxu0
  %v633 = vadd.f32 %v460, %v632
  %v634 = vpop.f32.mrb[0].mxu0
  %v635 = vpop.f32.mrb[0].mxu0
  %v636 = vadd.f32 %v460, %v635
  %v637 = vpop.f32.mrb[0].mxu0
  %638 = vmatprep.mubr.bf16.mxu0 0
  %639 = vmatmul.mubr.bf16.gmra.mrb[0].mxu0 %v452
  %v640 = vpop.f32.mrb[0].mxu0
  %v641 = vadd.f32 %v460, %v640
  %v642 = vpop.f32.mrb[0].mxu0
  %v643 = vpop.f32.mrb[0].mxu0
  %v644 = vadd.f32 %v460, %v643
  %v645 = vpop.f32.mrb[0].mxu0
  %646 = vmatprep.mubr.bf16.mxu0 0
  %647 = vmatmul.mubr.bf16.gmra.mrb[0].mxu0 %v453
  %v648 = vpop.f32.mrb[0].mxu0
  %v649 = vadd.f32 %v460, %v648
  %v650 = vpop.f32.mrb[0].mxu0
  %v651 = vpop.f32.mrb[0].mxu0
  %v652 = vadd.f32 %v460, %v651
  %v653 = vpop.f32.mrb[0].mxu0
  %654 = vmatprep.mubr.bf16.mxu0 0
  %655 = vmatmul.mubr.bf16.gmra.mrb[0].mxu0 %v454
  %v656 = vpop.f32.mrb[0].mxu0
  %v657 = vadd.f32 %v460, %v656
  %v658 = vpop.f32.mrb[0].mxu0
  %v659 = vpop.f32.mrb[0].mxu0
  %v660 = vadd.f32 %v460, %v659
  %v661 = vpop.f32.mrb[0].mxu0
  %662 = vmatprep.mubr.bf16.mxu0 0
  %663 = vmatmul.mubr.bf16.gmra.mrb[0].mxu0 %v455
  %v664 = vpop.f32.mrb[0].mxu0
  %v665 = vadd.f32 %v460, %v664
  %v666 = vpop.f32.mrb[0].mxu0
  %v667 = vpop.f32.mrb[0].mxu0
  %v668 = vadd.f32 %v460, %v667
  %v669 = vpop.f32.mrb[0].mxu0
  %670 = vdwg.mxu0
  %v671 = vmax.f32 %v545, 0.0
  %v672 = vmax.f32 %v548, 0.0
  %v673 = vmax.f32 %v553, 0.0
  %v674 = vmax.f32 %v556, 0.0
  %v675 = vmax.f32 %v561, 0.0
  %v676 = vmax.f32 %v564, 0.0
  %v677 = vmax.f32 %v569, 0.0
  %v678 = vmax.f32 %v572, 0.0
  %v679 = vmax.f32 %v577, 0.0
  %v680 = vmax.f32 %v580, 0.0
  %v681 = vmax.f32 %v585, 0.0
  %v682 = vmax.f32 %v588, 0.0
  %v683 = vmax.f32 %v593, 0.0
  %v684 = vmax.f32 %v596, 0.0
  %v685 = vmax.f32 %v601, 0.0
  %v686 = vmax.f32 %v604, 0.0
  %v687 = vmax.f32 %v609, 0.0
  %v688 = vmax.f32 %v612, 0.0
  %v689 = vmax.f32 %v617, 0.0
  %v690 = vmax.f32 %v620, 0.0
  %v691 = vmax.f32 %v625, 0.0
  %v692 = vmax.f32 %v628, 0.0
  %v693 = vmax.f32 %v633, 0.0
  %v694 = vmax.f32 %v636, 0.0
  %v695 = vmax.f32 %v641, 0.0
  %v696 = vmax.f32 %v644, 0.0
  %v697 = vmax.f32 %v649, 0.0
  %v698 = vmax.f32 %v652, 0.0
  %v699 = vmax.f32 %v657, 0.0
  %v700 = vmax.f32 %v660, 0.0
  %v701 = vmax.f32 %v665, 0.0
  %v702 = vmax.f32 %v668, 0.0
  %v703 = vstv %s55
  %vm704 = vcmask 261120
  %v706 = vsel %vm704, %v54, 0
  %v709 = vsel %vm704, %v671, 0
  %v712 = vsel %vm704, %v672, 0
  %v715 = vsel %vm704, %v673, 0
  %v718 = vsel %vm704, %v674, 0
  %v721 = vsel %vm704, %v675, 0
  %v724 = vsel %vm704, %v676, 0
  %v727 = vsel %vm704, %v677, 0
  %v730 = vsel %vm704, %v678, 0
  %v733 = vsel %vm704, %v679, 0
  %v736 = vsel %vm704, %v680, 0
  %v739 = vsel %vm704, %v681, 0
  %v742 = vsel %vm704, %v682, 0
  %v745 = vsel %vm704, %v683, 0
  %v748 = vsel %vm704, %v684, 0
  %v751 = vsel %vm704, %v685, 0
  %v754 = vsel %vm704, %v686, 0
  %v757 = vsel %vm704, %v687, 0
  %v760 = vsel %vm704, %v688, 0
  %v763 = vsel %vm704, %v689, 0
  %v766 = vsel %vm704, %v690, 0
  %v769 = vsel %vm704, %v691, 0
  %v772 = vsel %vm704, %v692, 0
  %v775 = vsel %vm704, %v693, 0
  %v778 = vsel %vm704, %v694, 0
  %v781 = vsel %vm704, %v695, 0
  %v784 = vsel %vm704, %v696, 0
  %v787 = vsel %vm704, %v697, 0
  %v790 = vsel %vm704, %v698, 0
  %v793 = vsel %vm704, %v699, 0
  %v796 = vsel %vm704, %v700, 0
  %v799 = vsel %vm704, %v701, 0
  %v802 = vsel %vm704, %v702, 0
  %804 = vmatprep.subr.mxu0 0.0
  %805 = vmatpush1.xpose.msra.mxu0 %v709
  %806 = vmatprep.subr.mxu0 0.0
  %807 = vmatpush1.xpose.msra.mxu0 %v712
  %808 = vmatprep.subr.mxu0 0.0
  %809 = vmatpush1.xpose.msra.mxu0 %v715
  %810 = vmatprep.subr.mxu0 0.0
  %811 = vmatpush1.xpose.msra.mxu0 %v718
  %812 = vmatprep.subr.mxu0 0.0
  %813 = vmatpush1.xpose.msra.mxu0 %v721
  %814 = vmatprep.subr.mxu0 0.0
  %815 = vmatpush1.xpose.msra.mxu0 %v724
  %816 = vmatprep.subr.mxu0 0.0
  %817 = vmatpush1.xpose.msra.mxu0 %v727
  %818 = vmatprep.subr.mxu0 0.0
  %819 = vmatpush1.xpose.msra.mxu0 %v730
  %820 = vmatprep.subr.mxu0 0.0
  %821 = vmatpush1.xpose.msra.mxu0 %v733
  %822 = vmatprep.subr.mxu0 0.0
  %823 = vmatpush1.xpose.msra.mxu0 %v736
  %824 = vmatprep.subr.mxu0 0.0
  %825 = vmatpush1.xpose.msra.mxu0 %v739
  %826 = vmatprep.subr.mxu0 0.0
  %827 = vmatpush1.xpose.msra.mxu0 %v742
  %828 = vmatprep.subr.mxu0 0.0
  %829 = vmatpush1.xpose.msra.mxu0 %v745
  %830 = vmatprep.subr.mxu0 0.0
  %831 = vmatpush1.xpose.msra.mxu0 %v748
  %832 = vmatprep.subr.mxu0 0.0
  %833 = vmatpush1.xpose.msra.mxu0 %v751
  %834 = vmatprep.subr.mxu0 0.0
  %835 = vmatpush1.xpose.msra.mxu0 %v754
  %836 = vmatprep.subr.mxu0 0.0
  %837 = vmatpush1.xpose.msra.mxu0 %v757
  %838 = vmatprep.subr.mxu0 0.0
  %839 = vmatpush1.xpose.msra.mxu0 %v760
  %840 = vmatprep.subr.mxu0 0.0
  %841 = vmatpush1.xpose.msra.mxu0 %v763
  %842 = vmatprep.subr.mxu0 0.0
  %843 = vmatpush1.xpose.msra.mxu0 %v766
  %844 = vmatprep.subr.mxu0 0.0
  %845 = vmatpush1.xpose.msra.mxu0 %v769
  %846 = vmatprep.subr.mxu0 0.0
  %847 = vmatpush1.xpose.msra.mxu0 %v772
  %848 = vmatprep.subr.mxu0 0.0
  %849 = vmatpush1.xpose.msra.mxu0 %v775
  %850 = vmatprep.subr.mxu0 0.0
  %851 = vmatpush1.xpose.msra.mxu0 %v778
  %852 = vmatprep.subr.mxu0 0.0
  %853 = vmatpush1.xpose.msra.mxu0 %v781
  %854 = vmatprep.subr.mxu0 0.0
  %855 = vmatpush1.xpose.msra.mxu0 %v784
  %856 = vmatprep.subr.mxu0 0.0
  %857 = vmatpush1.xpose.msra.mxu0 %v787
  %858 = vmatprep.subr.mxu0 0.0
  %859 = vmatpush1.xpose.msra.mxu0 %v790
  %860 = vmatprep.subr.mxu0 0.0
  %861 = vmatpush1.xpose.msra.mxu0 %v793
  %862 = vmatprep.subr.mxu0 0.0
  %863 = vmatpush1.xpose.msra.mxu0 %v796
  %864 = vmatprep.subr.mxu0 0.0
  %865 = vmatpush1.xpose.msra.mxu0 %v799
  %866 = vmatprep.subr.mxu0 0.0
  %867 = vmatpush1.xpose.msra.mxu0 %v802
  %868 = vmatprep.mubr.f32.mxu0 0.0
  %869 = vmatmul.mubr.f32.gmra.mrb[0].mxu0 %v706
  %v870 = vpop.f32.mrb[0].mxu0
  %v871 = vadd.f32 %v703, %v870
  %v872 = vpop.f32.mrb[0].mxu0
  %v873 = vadd.f32 %v703, %v872
  %874 = vdwg.mxu0
  %v877 = vcombine.low %v871, %v873
  %v879 = vunpack.c.l.s4 1966171168
  %v880 = vunpack.c.0.s8 %v879
  %v881 = vlaneseq
  %v882 = vshrl.u32 %v881, 7
  %v883 = vsub.s32 %v880, %v882
  %v884 = vrot.slane %v877, %v883
  %v886 = vunpack.c.l.s4 1966171168
  %v887 = vunpack.c.0.s8 %v886
  %v888 = vlaneseq
  %v889 = vshrl.u32 %v888, 7
  %v890 = vsub.s32 %v887, %v889
  %v891 = vrot.slane %v884, %v890
  %v893 = vlaneseq
  %vm894 = vcmp.ge.s32.totalorder %v893, 0
  %vm895 = vcmp.lt.s32.totalorder %v893, 256
  %vm896 = vmand %vm894, %vm895
  %897 = vst.msk [vmem:[%s7] ss:$2 sm:$0x3] %vm896, %v891
  %s898 = scalar_lea.vmem %s0, 128
  %v899 = vld [vmem:[%s898] sm:$0xf]
  %v900 = vld [vmem:[%s898 + $0x4] sm:$0xf]
  %v901 = vld [vmem:[%s898 + $0x8] sm:$0xf]
  %v902 = vld [vmem:[%s898 + $0xc] sm:$0xf]
  %v903 = vld [vmem:[%s898 + $0x10] sm:$0xf]
  %v904 = vld [vmem:[%s898 + $0x14] sm:$0xf]
  %v905 = vld [vmem:[%s898 + $0x18] sm:$0xf]
  %v906 = vld [vmem:[%s898 + $0x1c] sm:$0xf]
  %v907 = vld [vmem:[%s898 + $0x20] sm:$0xf]
  %v908 = vld [vmem:[%s898 + $0x24] sm:$0xf]
  %v909 = vld [vmem:[%s898 + $0x28] sm:$0xf]
  %v910 = vld [vmem:[%s898 + $0x2c] sm:$0xf]
  %v911 = vld [vmem:[%s898 + $0x30] sm:$0xf]
  %v912 = vld [vmem:[%s898 + $0x34] sm:$0xf]
  %v913 = vld [vmem:[%s898 + $0x38] sm:$0xf]
  %v914 = vld [vmem:[%s898 + $0x3c] sm:$0xf]
  %v915 = vld [vmem:[%s898 + $0x40] sm:$0xf]
  %v916 = vld [vmem:[%s898 + $0x44] sm:$0xf]
  %v917 = vld [vmem:[%s898 + $0x48] sm:$0xf]
  %v918 = vld [vmem:[%s898 + $0x4c] sm:$0xf]
  %v919 = vld [vmem:[%s898 + $0x50] sm:$0xf]
  %v920 = vld [vmem:[%s898 + $0x54] sm:$0xf]
  %v921 = vld [vmem:[%s898 + $0x58] sm:$0xf]
  %v922 = vld [vmem:[%s898 + $0x5c] sm:$0xf]
  %v923 = vld [vmem:[%s898 + $0x60] sm:$0xf]
  %v924 = vld [vmem:[%s898 + $0x64] sm:$0xf]
  %v925 = vld [vmem:[%s898 + $0x68] sm:$0xf]
  %v926 = vld [vmem:[%s898 + $0x6c] sm:$0xf]
  %v927 = vld [vmem:[%s898 + $0x70] sm:$0xf]
  %v928 = vld [vmem:[%s898 + $0x74] sm:$0xf]
  %v929 = vld [vmem:[%s898 + $0x78] sm:$0xf]
  %v930 = vld [vmem:[%s898 + $0x7c] sm:$0xf]
  %v963 = vunpack.c.l.b16 %v899
  %v964 = vunpack.c.l.b16 %v900
  %v965 = vunpack.c.l.b16 %v901
  %v966 = vunpack.c.l.b16 %v902
  %v967 = vunpack.c.l.b16 %v903
  %v968 = vunpack.c.l.b16 %v904
  %v969 = vunpack.c.l.b16 %v905
  %v970 = vunpack.c.l.b16 %v906
  %v971 = vunpack.c.l.b16 %v907
  %v972 = vunpack.c.l.b16 %v908
  %v973 = vunpack.c.l.b16 %v909
  %v974 = vunpack.c.l.b16 %v910
  %v975 = vunpack.c.l.b16 %v911
  %v976 = vunpack.c.l.b16 %v912
  %v977 = vunpack.c.l.b16 %v913
  %v978 = vunpack.c.l.b16 %v914
  %v979 = vunpack.c.l.b16 %v915
  %v980 = vunpack.c.l.b16 %v916
  %v981 = vunpack.c.l.b16 %v917
  %v982 = vunpack.c.l.b16 %v918
  %v983 = vunpack.c.l.b16 %v919
  %v984 = vunpack.c.l.b16 %v920
  %v985 = vunpack.c.l.b16 %v921
  %v986 = vunpack.c.l.b16 %v922
  %v987 = vunpack.c.l.b16 %v923
  %v988 = vunpack.c.l.b16 %v924
  %v989 = vunpack.c.l.b16 %v925
  %v990 = vunpack.c.l.b16 %v926
  %v991 = vunpack.c.l.b16 %v927
  %v992 = vunpack.c.l.b16 %v928
  %v993 = vunpack.c.l.b16 %v929
  %v994 = vunpack.c.l.b16 %v930
  %v995 = vpack.c.b16 %v964, %v963
  %v996 = vpack.c.b16 %v966, %v965
  %v997 = vpack.c.b16 %v968, %v967
  %v998 = vpack.c.b16 %v970, %v969
  %v999 = vpack.c.b16 %v972, %v971
  %v1000 = vpack.c.b16 %v974, %v973
  %v1001 = vpack.c.b16 %v976, %v975
  %v1002 = vpack.c.b16 %v978, %v977
  %v1003 = vpack.c.b16 %v980, %v979
  %v1004 = vpack.c.b16 %v982, %v981
  %v1005 = vpack.c.b16 %v984, %v983
  %v1006 = vpack.c.b16 %v986, %v985
  %v1007 = vpack.c.b16 %v988, %v987
  %v1008 = vpack.c.b16 %v990, %v989
  %v1009 = vpack.c.b16 %v992, %v991
  %v1010 = vpack.c.b16 %v994, %v993
  %v1012 = vsel %vm198, %v995, 0
  %v1015 = vsel %vm198, %v996, 0
  %v1018 = vsel %vm198, %v997, 0
  %v1021 = vsel %vm198, %v998, 0
  %v1024 = vsel %vm198, %v999, 0
  %v1027 = vsel %vm198, %v1000, 0
  %v1030 = vsel %vm198, %v1001, 0
  %v1033 = vsel %vm198, %v1002, 0
  %v1036 = vsel %vm198, %v1003, 0
  %v1039 = vsel %vm198, %v1004, 0
  %v1042 = vsel %vm198, %v1005, 0
  %v1045 = vsel %vm198, %v1006, 0
  %v1048 = vsel %vm198, %v1007, 0
  %v1051 = vsel %vm198, %v1008, 0
  %v1054 = vsel %vm198, %v1009, 0
  %v1057 = vsel %vm198, %v1010, 0
  %1059 = vmatprep.subr.bf16.mxu0 0
  %1060 = vmatpush1.bf16.msra.mxu0 %v190
  %1061 = vmatprep.subr.bf16.mxu0 0
  %1062 = vmatpush1.bf16.msra.mxu0 %v191
  %1063 = vmatprep.subr.bf16.mxu0 0
  %1064 = vmatpush1.bf16.msra.mxu0 %v192
  %1065 = vmatprep.subr.bf16.mxu0 0
  %1066 = vmatpush1.bf16.msra.mxu0 %v193
  %1067 = vmatprep.subr.bf16.mxu0 0
  %1068 = vmatpush1.bf16.msra.mxu0 0
  %1069 = vmatprep.subr.bf16.mxu0 0
  %1070 = vmatpush1.bf16.msra.mxu0 0
  %1071 = vmatprep.subr.bf16.mxu0 0
  %1072 = vmatpush1.bf16.msra.mxu0 0
  %1073 = vmatprep.subr.bf16.mxu0 0
  %1074 = vmatpush1.bf16.msra.mxu0 0
  %1075 = vmatprep.subr.bf16.mxu0 0
  %1076 = vmatpush1.bf16.msra.mxu0 0
  %1077 = vmatprep.subr.bf16.mxu0 0
  %1078 = vmatpush1.bf16.msra.mxu0 0
  %1079 = vmatprep.subr.bf16.mxu0 0
  %1080 = vmatpush1.bf16.msra.mxu0 0
  %1081 = vmatprep.subr.bf16.mxu0 0
  %1082 = vmatpush1.bf16.msra.mxu0 0
  %1083 = vmatprep.subr.bf16.mxu0 0
  %1084 = vmatpush1.bf16.msra.mxu0 0
  %1085 = vmatprep.subr.bf16.mxu0 0
  %1086 = vmatpush1.bf16.msra.mxu0 0
  %1087 = vmatprep.subr.bf16.mxu0 0
  %1088 = vmatpush1.bf16.msra.mxu0 0
  %1089 = vmatprep.subr.bf16.mxu0 0
  %1090 = vmatpush1.bf16.msra.mxu0 0
  %1091 = vmatprep.mubr.bf16.mxu0 0
  %1092 = vmatmul.mubr.bf16.gmra.mrb[0].mxu0 %v1012
  %v1093 = vpop.f32.mrb[0].mxu0
  %v1094 = vadd.f32 %v92, %v1093
  %v1095 = vpop.f32.mrb[0].mxu0
  %v1096 = vpop.f32.mrb[0].mxu0
  %v1097 = vadd.f32 %v92, %v1096
  %v1098 = vpop.f32.mrb[0].mxu0
  %1099 = vmatprep.mubr.bf16.mxu0 0
  %1100 = vmatmul.mubr.bf16.gmra.mrb[0].mxu0 %v1015
  %v1101 = vpop.f32.mrb[0].mxu0
  %v1102 = vadd.f32 %v92, %v1101
  %v1103 = vpop.f32.mrb[0].mxu0
  %v1104 = vpop.f32.mrb[0].mxu0
  %v1105 = vadd.f32 %v92, %v1104
  %v1106 = vpop.f32.mrb[0].mxu0
  %1107 = vmatprep.mubr.bf16.mxu0 0
  %1108 = vmatmul.mubr.bf16.gmra.mrb[0].mxu0 %v1018
  %v1109 = vpop.f32.mrb[0].mxu0
  %v1110 = vadd.f32 %v92, %v1109
  %v1111 = vpop.f32.mrb[0].mxu0
  %v1112 = vpop.f32.mrb[0].mxu0
  %v1113 = vadd.f32 %v92, %v1112
  %v1114 = vpop.f32.mrb[0].mxu0
  %1115 = vmatprep.mubr.bf16.mxu0 0
  %1116 = vmatmul.mubr.bf16.gmra.mrb[0].mxu0 %v1021
  %v1117 = vpop.f32.mrb[0].mxu0
  %v1118 = vadd.f32 %v92, %v1117
  %v1119 = vpop.f32.mrb[0].mxu0
  %v1120 = vpop.f32.mrb[0].mxu0
  %v1121 = vadd.f32 %v92, %v1120
  %v1122 = vpop.f32.mrb[0].mxu0
  %1123 = vmatprep.mubr.bf16.mxu0 0
  %1124 = vmatmul.mubr.bf16.gmra.mrb[0].mxu0 %v1024
  %v1125 = vpop.f32.mrb[0].mxu0
  %v1126 = vadd.f32 %v92, %v1125
  %v1127 = vpop.f32.mrb[0].mxu0
  %v1128 = vpop.f32.mrb[0].mxu0
  %v1129 = vadd.f32 %v92, %v1128
  %v1130 = vpop.f32.mrb[0].mxu0
  %1131 = vmatprep.mubr.bf16.mxu0 0
  %1132 = vmatmul.mubr.bf16.gmra.mrb[0].mxu0 %v1027
  %v1133 = vpop.f32.mrb[0].mxu0
  %v1134 = vadd.f32 %v92, %v1133
  %v1135 = vpop.f32.mrb[0].mxu0
  %v1136 = vpop.f32.mrb[0].mxu0
  %v1137 = vadd.f32 %v92, %v1136
  %v1138 = vpop.f32.mrb[0].mxu0
  %1139 = vmatprep.mubr.bf16.mxu0 0
  %1140 = vmatmul.mubr.bf16.gmra.mrb[0].mxu0 %v1030
  %v1141 = vpop.f32.mrb[0].mxu0
  %v1142 = vadd.f32 %v92, %v1141
  %v1143 = vpop.f32.mrb[0].mxu0
  %v1144 = vpop.f32.mrb[0].mxu0
  %v1145 = vadd.f32 %v92, %v1144
  %v1146 = vpop.f32.mrb[0].mxu0
  %1147 = vmatprep.mubr.bf16.mxu0 0
  %1148 = vmatmul.mubr.bf16.gmra.mrb[0].mxu0 %v1033
  %v1149 = vpop.f32.mrb[0].mxu0
  %v1150 = vadd.f32 %v92, %v1149
  %v1151 = vpop.f32.mrb[0].mxu0
  %v1152 = vpop.f32.mrb[0].mxu0
  %v1153 = vadd.f32 %v92, %v1152
  %v1154 = vpop.f32.mrb[0].mxu0
  %1155 = vmatprep.mubr.bf16.mxu0 0
  %1156 = vmatmul.mubr.bf16.gmra.mrb[0].mxu0 %v1036
  %v1157 = vpop.f32.mrb[0].mxu0
  %v1158 = vadd.f32 %v92, %v1157
  %v1159 = vpop.f32.mrb[0].mxu0
  %v1160 = vpop.f32.mrb[0].mxu0
  %v1161 = vadd.f32 %v92, %v1160
  %v1162 = vpop.f32.mrb[0].mxu0
  %1163 = vmatprep.mubr.bf16.mxu0 0
  %1164 = vmatmul.mubr.bf16.gmra.mrb[0].mxu0 %v1039
  %v1165 = vpop.f32.mrb[0].mxu0
  %v1166 = vadd.f32 %v92, %v1165
  %v1167 = vpop.f32.mrb[0].mxu0
  %v1168 = vpop.f32.mrb[0].mxu0
  %v1169 = vadd.f32 %v92, %v1168
  %v1170 = vpop.f32.mrb[0].mxu0
  %1171 = vmatprep.mubr.bf16.mxu0 0
  %1172 = vmatmul.mubr.bf16.gmra.mrb[0].mxu0 %v1042
  %v1173 = vpop.f32.mrb[0].mxu0
  %v1174 = vadd.f32 %v92, %v1173
  %v1175 = vpop.f32.mrb[0].mxu0
  %v1176 = vpop.f32.mrb[0].mxu0
  %v1177 = vadd.f32 %v92, %v1176
  %v1178 = vpop.f32.mrb[0].mxu0
  %1179 = vmatprep.mubr.bf16.mxu0 0
  %1180 = vmatmul.mubr.bf16.gmra.mrb[0].mxu0 %v1045
  %v1181 = vpop.f32.mrb[0].mxu0
  %v1182 = vadd.f32 %v92, %v1181
  %v1183 = vpop.f32.mrb[0].mxu0
  %v1184 = vpop.f32.mrb[0].mxu0
  %v1185 = vadd.f32 %v92, %v1184
  %v1186 = vpop.f32.mrb[0].mxu0
  %1187 = vmatprep.mubr.bf16.mxu0 0
  %1188 = vmatmul.mubr.bf16.gmra.mrb[0].mxu0 %v1048
  %v1189 = vpop.f32.mrb[0].mxu0
  %v1190 = vadd.f32 %v92, %v1189
  %v1191 = vpop.f32.mrb[0].mxu0
  %v1192 = vpop.f32.mrb[0].mxu0
  %v1193 = vadd.f32 %v92, %v1192
  %v1194 = vpop.f32.mrb[0].mxu0
  %1195 = vmatprep.mubr.bf16.mxu0 0
  %1196 = vmatmul.mubr.bf16.gmra.mrb[0].mxu0 %v1051
  %v1197 = vpop.f32.mrb[0].mxu0
  %v1198 = vadd.f32 %v92, %v1197
  %v1199 = vpop.f32.mrb[0].mxu0
  %v1200 = vpop.f32.mrb[0].mxu0
  %v1201 = vadd.f32 %v92, %v1200
  %v1202 = vpop.f32.mrb[0].mxu0
  %1203 = vmatprep.mubr.bf16.mxu0 0
  %1204 = vmatmul.mubr.bf16.gmra.mrb[0].mxu0 %v1054
  %v1205 = vpop.f32.mrb[0].mxu0
  %v1206 = vadd.f32 %v92, %v1205
  %v1207 = vpop.f32.mrb[0].mxu0
  %v1208 = vpop.f32.mrb[0].mxu0
  %v1209 = vadd.f32 %v92, %v1208
  %v1210 = vpop.f32.mrb[0].mxu0
  %1211 = vmatprep.mubr.bf16.mxu0 0
  %1212 = vmatmul.mubr.bf16.gmra.mrb[0].mxu0 %v1057
  %v1213 = vpop.f32.mrb[0].mxu0
  %v1214 = vadd.f32 %v92, %v1213
  %v1215 = vpop.f32.mrb[0].mxu0
  %v1216 = vpop.f32.mrb[0].mxu0
  %v1217 = vadd.f32 %v92, %v1216
  %v1218 = vpop.f32.mrb[0].mxu0
  %1219 = vdwg.mxu0
  %v1220 = vmax.f32 %v1094, 0.0
  %v1221 = vmax.f32 %v1097, 0.0
  %v1222 = vmax.f32 %v1102, 0.0
  %v1223 = vmax.f32 %v1105, 0.0
  %v1224 = vmax.f32 %v1110, 0.0
  %v1225 = vmax.f32 %v1113, 0.0
  %v1226 = vmax.f32 %v1118, 0.0
  %v1227 = vmax.f32 %v1121, 0.0
  %v1228 = vmax.f32 %v1126, 0.0
  %v1229 = vmax.f32 %v1129, 0.0
  %v1230 = vmax.f32 %v1134, 0.0
  %v1231 = vmax.f32 %v1137, 0.0
  %v1232 = vmax.f32 %v1142, 0.0
  %v1233 = vmax.f32 %v1145, 0.0
  %v1234 = vmax.f32 %v1150, 0.0
  %v1235 = vmax.f32 %v1153, 0.0
  %v1236 = vmax.f32 %v1158, 0.0
  %v1237 = vmax.f32 %v1161, 0.0
  %v1238 = vmax.f32 %v1166, 0.0
  %v1239 = vmax.f32 %v1169, 0.0
  %v1240 = vmax.f32 %v1174, 0.0
  %v1241 = vmax.f32 %v1177, 0.0
  %v1242 = vmax.f32 %v1182, 0.0
  %v1243 = vmax.f32 %v1185, 0.0
  %v1244 = vmax.f32 %v1190, 0.0
  %v1245 = vmax.f32 %v1193, 0.0
  %v1246 = vmax.f32 %v1198, 0.0
  %v1247 = vmax.f32 %v1201, 0.0
  %v1248 = vmax.f32 %v1206, 0.0
  %v1249 = vmax.f32 %v1209, 0.0
  %v1250 = vmax.f32 %v1214, 0.0
  %v1251 = vmax.f32 %v1217, 0.0
  %v1252 = vpack.c.bf16 %v1221, %v1220
  %v1253 = vpack.c.bf16 %v1223, %v1222
  %v1254 = vpack.c.bf16 %v1225, %v1224
  %v1255 = vpack.c.bf16 %v1227, %v1226
  %v1256 = vpack.c.bf16 %v1229, %v1228
  %v1257 = vpack.c.bf16 %v1231, %v1230
  %v1258 = vpack.c.bf16 %v1233, %v1232
  %v1259 = vpack.c.bf16 %v1235, %v1234
  %v1260 = vpack.c.bf16 %v1237, %v1236
  %v1261 = vpack.c.bf16 %v1239, %v1238
  %v1262 = vpack.c.bf16 %v1241, %v1240
  %v1263 = vpack.c.bf16 %v1243, %v1242
  %v1264 = vpack.c.bf16 %v1245, %v1244
  %v1265 = vpack.c.bf16 %v1247, %v1246
  %v1266 = vpack.c.bf16 %v1249, %v1248
  %v1267 = vpack.c.bf16 %v1251, %v1250
  %1268 = vmatprep.subr.bf16.mxu0 0
  %1269 = vmatpush1.bf16.msra.mxu0 %v494
  %1270 = vmatprep.subr.bf16.mxu0 0
  %1271 = vmatpush1.bf16.msra.mxu0 %v495
  %1272 = vmatprep.subr.bf16.mxu0 0
  %1273 = vmatpush1.bf16.msra.mxu0 %v496
  %1274 = vmatprep.subr.bf16.mxu0 0
  %1275 = vmatpush1.bf16.msra.mxu0 %v497
  %1276 = vmatprep.subr.bf16.mxu0 0
  %1277 = vmatpush1.bf16.msra.mxu0 %v498
  %1278 = vmatprep.subr.bf16.mxu0 0
  %1279 = vmatpush1.bf16.msra.mxu0 %v499
  %1280 = vmatprep.subr.bf16.mxu0 0
  %1281 = vmatpush1.bf16.msra.mxu0 %v500
  %1282 = vmatprep.subr.bf16.mxu0 0
  %1283 = vmatpush1.bf16.msra.mxu0 %v501
  %1284 = vmatprep.subr.bf16.mxu0 0
  %1285 = vmatpush1.bf16.msra.mxu0 0
  %1286 = vmatprep.subr.bf16.mxu0 0
  %1287 = vmatpush1.bf16.msra.mxu0 0
  %1288 = vmatprep.subr.bf16.mxu0 0
  %1289 = vmatpush1.bf16.msra.mxu0 0
  %1290 = vmatprep.subr.bf16.mxu0 0
  %1291 = vmatpush1.bf16.msra.mxu0 0
  %1292 = vmatprep.subr.bf16.mxu0 0
  %1293 = vmatpush1.bf16.msra.mxu0 0
  %1294 = vmatprep.subr.bf16.mxu0 0
  %1295 = vmatpush1.bf16.msra.mxu0 0
  %1296 = vmatprep.subr.bf16.mxu0 0
  %1297 = vmatpush1.bf16.msra.mxu0 0
  %1298 = vmatprep.subr.bf16.mxu0 0
  %1299 = vmatpush1.bf16.msra.mxu0 0
  %1300 = vmatprep.mubr.bf16.mxu0 0
  %1301 = vmatmul.mubr.bf16.gmra.mrb[0].mxu0 %v1252
  %v1302 = vpop.f32.mrb[0].mxu0
  %v1303 = vadd.f32 %v460, %v1302
  %v1304 = vpop.f32.mrb[0].mxu0
  %v1305 = vpop.f32.mrb[0].mxu0
  %v1306 = vadd.f32 %v460, %v1305
  %v1307 = vpop.f32.mrb[0].mxu0
  %1308 = vmatprep.mubr.bf16.mxu0 0
  %1309 = vmatmul.mubr.bf16.gmra.mrb[0].mxu0 %v1253
  %v1310 = vpop.f32.mrb[0].mxu0
  %v1311 = vadd.f32 %v460, %v1310
  %v1312 = vpop.f32.mrb[0].mxu0
  %v1313 = vpop.f32.mrb[0].mxu0
  %v1314 = vadd.f32 %v460, %v1313
  %v1315 = vpop.f32.mrb[0].mxu0
  %1316 = vmatprep.mubr.bf16.mxu0 0
  %1317 = vmatmul.mubr.bf16.gmra.mrb[0].mxu0 %v1254
  %v1318 = vpop.f32.mrb[0].mxu0
  %v1319 = vadd.f32 %v460, %v1318
  %v1320 = vpop.f32.mrb[0].mxu0
  %v1321 = vpop.f32.mrb[0].mxu0
  %v1322 = vadd.f32 %v460, %v1321
  %v1323 = vpop.f32.mrb[0].mxu0
  %1324 = vmatprep.mubr.bf16.mxu0 0
  %1325 = vmatmul.mubr.bf16.gmra.mrb[0].mxu0 %v1255
  %v1326 = vpop.f32.mrb[0].mxu0
  %v1327 = vadd.f32 %v460, %v1326
  %v1328 = vpop.f32.mrb[0].mxu0
  %v1329 = vpop.f32.mrb[0].mxu0
  %v1330 = vadd.f32 %v460, %v1329
  %v1331 = vpop.f32.mrb[0].mxu0
  %1332 = vmatprep.mubr.bf16.mxu0 0
  %1333 = vmatmul.mubr.bf16.gmra.mrb[0].mxu0 %v1256
  %v1334 = vpop.f32.mrb[0].mxu0
  %v1335 = vadd.f32 %v460, %v1334
  %v1336 = vpop.f32.mrb[0].mxu0
  %v1337 = vpop.f32.mrb[0].mxu0
  %v1338 = vadd.f32 %v460, %v1337
  %v1339 = vpop.f32.mrb[0].mxu0
  %1340 = vmatprep.mubr.bf16.mxu0 0
  %1341 = vmatmul.mubr.bf16.gmra.mrb[0].mxu0 %v1257
  %v1342 = vpop.f32.mrb[0].mxu0
  %v1343 = vadd.f32 %v460, %v1342
  %v1344 = vpop.f32.mrb[0].mxu0
  %v1345 = vpop.f32.mrb[0].mxu0
  %v1346 = vadd.f32 %v460, %v1345
  %v1347 = vpop.f32.mrb[0].mxu0
  %1348 = vmatprep.mubr.bf16.mxu0 0
  %1349 = vmatmul.mubr.bf16.gmra.mrb[0].mxu0 %v1258
  %v1350 = vpop.f32.mrb[0].mxu0
  %v1351 = vadd.f32 %v460, %v1350
  %v1352 = vpop.f32.mrb[0].mxu0
  %v1353 = vpop.f32.mrb[0].mxu0
  %v1354 = vadd.f32 %v460, %v1353
  %v1355 = vpop.f32.mrb[0].mxu0
  %1356 = vmatprep.mubr.bf16.mxu0 0
  %1357 = vmatmul.mubr.bf16.gmra.mrb[0].mxu0 %v1259
  %v1358 = vpop.f32.mrb[0].mxu0
  %v1359 = vadd.f32 %v460, %v1358
  %v1360 = vpop.f32.mrb[0].mxu0
  %v1361 = vpop.f32.mrb[0].mxu0
  %v1362 = vadd.f32 %v460, %v1361
  %v1363 = vpop.f32.mrb[0].mxu0
  %1364 = vmatprep.mubr.bf16.mxu0 0
  %1365 = vmatmul.mubr.bf16.gmra.mrb[0].mxu0 %v1260
  %v1366 = vpop.f32.mrb[0].mxu0
  %v1367 = vadd.f32 %v460, %v1366
  %v1368 = vpop.f32.mrb[0].mxu0
  %v1369 = vpop.f32.mrb[0].mxu0
  %v1370 = vadd.f32 %v460, %v1369
  %v1371 = vpop.f32.mrb[0].mxu0
  %1372 = vmatprep.mubr.bf16.mxu0 0
  %1373 = vmatmul.mubr.bf16.gmra.mrb[0].mxu0 %v1261
  %v1374 = vpop.f32.mrb[0].mxu0
  %v1375 = vadd.f32 %v460, %v1374
  %v1376 = vpop.f32.mrb[0].mxu0
  %v1377 = vpop.f32.mrb[0].mxu0
  %v1378 = vadd.f32 %v460, %v1377
  %v1379 = vpop.f32.mrb[0].mxu0
  %1380 = vmatprep.mubr.bf16.mxu0 0
  %1381 = vmatmul.mubr.bf16.gmra.mrb[0].mxu0 %v1262
  %v1382 = vpop.f32.mrb[0].mxu0
  %v1383 = vadd.f32 %v460, %v1382
  %v1384 = vpop.f32.mrb[0].mxu0
  %v1385 = vpop.f32.mrb[0].mxu0
  %v1386 = vadd.f32 %v460, %v1385
  %v1387 = vpop.f32.mrb[0].mxu0
  %1388 = vmatprep.mubr.bf16.mxu0 0
  %1389 = vmatmul.mubr.bf16.gmra.mrb[0].mxu0 %v1263
  %v1390 = vpop.f32.mrb[0].mxu0
  %v1391 = vadd.f32 %v460, %v1390
  %v1392 = vpop.f32.mrb[0].mxu0
  %v1393 = vpop.f32.mrb[0].mxu0
  %v1394 = vadd.f32 %v460, %v1393
  %v1395 = vpop.f32.mrb[0].mxu0
  %1396 = vmatprep.mubr.bf16.mxu0 0
  %1397 = vmatmul.mubr.bf16.gmra.mrb[0].mxu0 %v1264
  %v1398 = vpop.f32.mrb[0].mxu0
  %v1399 = vadd.f32 %v460, %v1398
  %v1400 = vpop.f32.mrb[0].mxu0
  %v1401 = vpop.f32.mrb[0].mxu0
  %v1402 = vadd.f32 %v460, %v1401
  %v1403 = vpop.f32.mrb[0].mxu0
  %1404 = vmatprep.mubr.bf16.mxu0 0
  %1405 = vmatmul.mubr.bf16.gmra.mrb[0].mxu0 %v1265
  %v1406 = vpop.f32.mrb[0].mxu0
  %v1407 = vadd.f32 %v460, %v1406
  %v1408 = vpop.f32.mrb[0].mxu0
  %v1409 = vpop.f32.mrb[0].mxu0
  %v1410 = vadd.f32 %v460, %v1409
  %v1411 = vpop.f32.mrb[0].mxu0
  %1412 = vmatprep.mubr.bf16.mxu0 0
  %1413 = vmatmul.mubr.bf16.gmra.mrb[0].mxu0 %v1266
  %v1414 = vpop.f32.mrb[0].mxu0
  %v1415 = vadd.f32 %v460, %v1414
  %v1416 = vpop.f32.mrb[0].mxu0
  %v1417 = vpop.f32.mrb[0].mxu0
  %v1418 = vadd.f32 %v460, %v1417
  %v1419 = vpop.f32.mrb[0].mxu0
  %1420 = vmatprep.mubr.bf16.mxu0 0
  %1421 = vmatmul.mubr.bf16.gmra.mrb[0].mxu0 %v1267
  %v1422 = vpop.f32.mrb[0].mxu0
  %v1423 = vadd.f32 %v460, %v1422
  %v1424 = vpop.f32.mrb[0].mxu0
  %v1425 = vpop.f32.mrb[0].mxu0
  %v1426 = vadd.f32 %v460, %v1425
  %v1427 = vpop.f32.mrb[0].mxu0
  %1428 = vdwg.mxu0
  %v1429 = vmax.f32 %v1303, 0.0
  %v1430 = vmax.f32 %v1306, 0.0
  %v1431 = vmax.f32 %v1311, 0.0
  %v1432 = vmax.f32 %v1314, 0.0
  %v1433 = vmax.f32 %v1319, 0.0
  %v1434 = vmax.f32 %v1322, 0.0
  %v1435 = vmax.f32 %v1327, 0.0
  %v1436 = vmax.f32 %v1330, 0.0
  %v1437 = vmax.f32 %v1335, 0.0
  %v1438 = vmax.f32 %v1338, 0.0
  %v1439 = vmax.f32 %v1343, 0.0
  %v1440 = vmax.f32 %v1346, 0.0
  %v1441 = vmax.f32 %v1351, 0.0
  %v1442 = vmax.f32 %v1354, 0.0
  %v1443 = vmax.f32 %v1359, 0.0
  %v1444 = vmax.f32 %v1362, 0.0
  %v1445 = vmax.f32 %v1367, 0.0
  %v1446 = vmax.f32 %v1370, 0.0
  %v1447 = vmax.f32 %v1375, 0.0
  %v1448 = vmax.f32 %v1378, 0.0
  %v1449 = vmax.f32 %v1383, 0.0
  %v1450 = vmax.f32 %v1386, 0.0
  %v1451 = vmax.f32 %v1391, 0.0
  %v1452 = vmax.f32 %v1394, 0.0
  %v1453 = vmax.f32 %v1399, 0.0
  %v1454 = vmax.f32 %v1402, 0.0
  %v1455 = vmax.f32 %v1407, 0.0
  %v1456 = vmax.f32 %v1410, 0.0
  %v1457 = vmax.f32 %v1415, 0.0
  %v1458 = vmax.f32 %v1418, 0.0
  %v1459 = vmax.f32 %v1423, 0.0
  %v1460 = vmax.f32 %v1426, 0.0
  %v1462 = vsel %vm704, %v1429, 0
  %v1465 = vsel %vm704, %v1430, 0
  %v1468 = vsel %vm704, %v1431, 0
  %v1471 = vsel %vm704, %v1432, 0
  %v1474 = vsel %vm704, %v1433, 0
  %v1477 = vsel %vm704, %v1434, 0
  %v1480 = vsel %vm704, %v1435, 0
  %v1483 = vsel %vm704, %v1436, 0
  %v1486 = vsel %vm704, %v1437, 0
  %v1489 = vsel %vm704, %v1438, 0
  %v1492 = vsel %vm704, %v1439, 0
  %v1495 = vsel %vm704, %v1440, 0
  %v1498 = vsel %vm704, %v1441, 0
  %v1501 = vsel %vm704, %v1442, 0
  %v1504 = vsel %vm704, %v1443, 0
  %v1507 = vsel %vm704, %v1444, 0
  %v1510 = vsel %vm704, %v1445, 0
  %v1513 = vsel %vm704, %v1446, 0
  %v1516 = vsel %vm704, %v1447, 0
  %v1519 = vsel %vm704, %v1448, 0
  %v1522 = vsel %vm704, %v1449, 0
  %v1525 = vsel %vm704, %v1450, 0
  %v1528 = vsel %vm704, %v1451, 0
  %v1531 = vsel %vm704, %v1452, 0
  %v1534 = vsel %vm704, %v1453, 0
  %v1537 = vsel %vm704, %v1454, 0
  %v1540 = vsel %vm704, %v1455, 0
  %v1543 = vsel %vm704, %v1456, 0
  %v1546 = vsel %vm704, %v1457, 0
  %v1549 = vsel %vm704, %v1458, 0
  %v1552 = vsel %vm704, %v1459, 0
  %v1555 = vsel %vm704, %v1460, 0
  %1557 = vmatprep.subr.mxu0 0.0
  %1558 = vmatpush1.xpose.msra.mxu0 %v1462
  %1559 = vmatprep.subr.mxu0 0.0
  %1560 = vmatpush1.xpose.msra.mxu0 %v1465
  %1561 = vmatprep.subr.mxu0 0.0
  %1562 = vmatpush1.xpose.msra.mxu0 %v1468
  %1563 = vmatprep.subr.mxu0 0.0
  %1564 = vmatpush1.xpose.msra.mxu0 %v1471
  %1565 = vmatprep.subr.mxu0 0.0
  %1566 = vmatpush1.xpose.msra.mxu0 %v1474
  %1567 = vmatprep.subr.mxu0 0.0
  %1568 = vmatpush1.xpose.msra.mxu0 %v1477
  %1569 = vmatprep.subr.mxu0 0.0
  %1570 = vmatpush1.xpose.msra.mxu0 %v1480
  %1571 = vmatprep.subr.mxu0 0.0
  %1572 = vmatpush1.xpose.msra.mxu0 %v1483
  %1573 = vmatprep.subr.mxu0 0.0
  %1574 = vmatpush1.xpose.msra.mxu0 %v1486
  %1575 = vmatprep.subr.mxu0 0.0
  %1576 = vmatpush1.xpose.msra.mxu0 %v1489
  %1577 = vmatprep.subr.mxu0 0.0
  %1578 = vmatpush1.xpose.msra.mxu0 %v1492
  %1579 = vmatprep.subr.mxu0 0.0
  %1580 = vmatpush1.xpose.msra.mxu0 %v1495
  %1581 = vmatprep.subr.mxu0 0.0
  %1582 = vmatpush1.xpose.msra.mxu0 %v1498
  %1583 = vmatprep.subr.mxu0 0.0
  %1584 = vmatpush1.xpose.msra.mxu0 %v1501
  %1585 = vmatprep.subr.mxu0 0.0
  %1586 = vmatpush1.xpose.msra.mxu0 %v1504
  %1587 = vmatprep.subr.mxu0 0.0
  %1588 = vmatpush1.xpose.msra.mxu0 %v1507
  %1589 = vmatprep.subr.mxu0 0.0
  %1590 = vmatpush1.xpose.msra.mxu0 %v1510
  %1591 = vmatprep.subr.mxu0 0.0
  %1592 = vmatpush1.xpose.msra.mxu0 %v1513
  %1593 = vmatprep.subr.mxu0 0.0
  %1594 = vmatpush1.xpose.msra.mxu0 %v1516
  %1595 = vmatprep.subr.mxu0 0.0
  %1596 = vmatpush1.xpose.msra.mxu0 %v1519
  %1597 = vmatprep.subr.mxu0 0.0
  %1598 = vmatpush1.xpose.msra.mxu0 %v1522
  %1599 = vmatprep.subr.mxu0 0.0
  %1600 = vmatpush1.xpose.msra.mxu0 %v1525
  %1601 = vmatprep.subr.mxu0 0.0
  %1602 = vmatpush1.xpose.msra.mxu0 %v1528
  %1603 = vmatprep.subr.mxu0 0.0
  %1604 = vmatpush1.xpose.msra.mxu0 %v1531
  %1605 = vmatprep.subr.mxu0 0.0
  %1606 = vmatpush1.xpose.msra.mxu0 %v1534
  %1607 = vmatprep.subr.mxu0 0.0
  %1608 = vmatpush1.xpose.msra.mxu0 %v1537
  %1609 = vmatprep.subr.mxu0 0.0
  %1610 = vmatpush1.xpose.msra.mxu0 %v1540
  %1611 = vmatprep.subr.mxu0 0.0
  %1612 = vmatpush1.xpose.msra.mxu0 %v1543
  %1613 = vmatprep.subr.mxu0 0.0
  %1614 = vmatpush1.xpose.msra.mxu0 %v1546
  %1615 = vmatprep.subr.mxu0 0.0
  %1616 = vmatpush1.xpose.msra.mxu0 %v1549
  %1617 = vmatprep.subr.mxu0 0.0
  %1618 = vmatpush1.xpose.msra.mxu0 %v1552
  %1619 = vmatprep.subr.mxu0 0.0
  %1620 = vmatpush1.xpose.msra.mxu0 %v1555
  %1621 = vmatprep.mubr.f32.mxu0 0.0
  %1622 = vmatmul.mubr.f32.gmra.mrb[0].mxu0 %v706
  %v1623 = vpop.f32.mrb[0].mxu0
  %v1624 = vadd.f32 %v703, %v1623
  %v1625 = vpop.f32.mrb[0].mxu0
  %v1626 = vadd.f32 %v703, %v1625
  %1627 = vdwg.mxu0
  %v1630 = vcombine.low %v1624, %v1626
  %v1632 = vunpack.c.l.s4 1966171168
  %v1633 = vunpack.c.0.s8 %v1632
  %v1634 = vlaneseq
  %v1635 = vshrl.u32 %v1634, 7
  %v1636 = vsub.s32 %v1633, %v1635
  %v1637 = vrot.slane %v1630, %v1636
  %v1639 = vunpack.c.l.s4 1966171168
  %v1640 = vunpack.c.0.s8 %v1639
  %v1641 = vlaneseq
  %v1642 = vshrl.u32 %v1641, 7
  %v1643 = vsub.s32 %v1640, %v1642
  %v1644 = vrot.slane %v1637, %v1643
  %s1646 = scalar_lea.vmem %s7, 1
  %1647 = vst.msk [vmem:[%s1646] ss:$2 sm:$0x3] %vm896, %v1644
  // Predicated region
  $region30: #{extractor_mlp_forward.1} parent=0 // pred_check
    _
  $region31: #{extractor_mlp_forward.1} parent=0 // pred_check_branch
    %1649 = sbr.rel (0) target = $region33
  $region32: #{extractor_mlp_forward.1} parent=0 // pred_region
    _
  $region33: #{extractor_mlp_forward.1} parent=0 // pred_fallthru
    _
  // Predicated region
  $region34: #{extractor_mlp_forward.1} parent=0 // pred_check
    _
  $region35: #{extractor_mlp_forward.1} parent=0 // pred_check_branch
    %1651 = sbr.rel (0) target = $region37
  $region36: #{extractor_mlp_forward.1} parent=0 // pred_region
    _
  $region37: #{extractor_mlp_forward.1} parent=0 // pred_fallthru
    _

</llo_original>
